<compile_context>
chip_gen: v6e
topology: v6e:2x2x1
jax: 0.10.0
libtpu: 0.0.40
codegen_flags: <defaults>
</compile_context>

<pallas_src>
import jax
import jax.numpy as jnp
import numpy as np
from jax.experimental import pallas as pl
from jax.experimental.pallas import tpu as pltpu


# ------------------------------------------------------------------ helpers

def _round_up(x, m):
    return ((x + m - 1) // m) * m


def _cdiv(a, b):
    return (a + b - 1) // b


def _pick_batch_block(batch):
    """Choose (block_batch, num_blocks).

    Small/medium batch -> ONE block (all rows in the MXU M dim, grid=(1,)).
    Large batch -> at least 2 blocks so dimension_semantics=("parallel",) can map one
    block to each of v7x's two TensorCores (harmless serial loop on v5e/v6e).
    """
    pb8 = _round_up(max(batch, 1), 8)
    if pb8 <= 128:
        nblk = 1
    else:
        nblk = max(2, _cdiv(pb8, 512))
    bb = _round_up(_cdiv(pb8, nblk), 8)
    return bb, nblk


# ------------------------------------------------------------------ kernel

def make_lstm_mlp_kernel(num_layers, seq, block_batch, hidden, input_size, fc_hidden):
    """Fused wavefront LSTM (all layers) + 2-layer MLP head, one batch block per call.

    Ref layout (BB = block_batch, L = num_layers, H = hidden, G = 4*H):
      x_ref    : (seq, BB, input_size)        time-major input, f32
      h0_ref   : (L, BB, H) f32               c0_ref : (L, BB, H) f32
      wih0_ref : (input_size, G) bf16         layer-0 input weights
      wcomb_ref: (L*H, L*G) bf16              block-bidiagonal [W_hh_l diag | W_ih_l super-diag]
      bcomb_ref: (1, L*G) f32                 per-layer combined biases, gate order i|f|g|o
      w1/b1/w2/b2 : FC head (bf16 weights, f32 biases)
      fc_ref   : (BB, seq*input_size) f32     lane-dense FC output slab
      st_ref   : (BB, 2*L*H) f32              packed [h_0|..|h_{L-1}|c_0|..|c_{L-1}]
      xw_ref   : VMEM scratch (seq*BB, G) f32 hoisted layer-0 input projection
      act_ref  : VMEM scratch (seq*BB, H) f32 final-layer activations (rows t*BB+b)
    """
    L, H, BB = num_layers, hidden, block_batch
    G = 4 * H
    bf16 = jnp.bfloat16
    f32 = jnp.float32

    def kernel(x_ref, h0_ref, c0_ref, wih0_ref, wcomb_ref, bcomb_ref,
               w1_ref, b1_ref, w2_ref, b2_ref, fc_ref, st_ref, xw_ref, act_ref):
        # Hoisted layer-0 input projection: ONE matmul covering every timestep.
        x_flat = x_ref[...].reshape(seq * BB, input_size)
        xw_ref[...] = jnp.dot(x_flat.astype(bf16), wih0_ref[...],
                              preferred_element_type=f32)

        # Weights / bias resident for the whole recurrence (hoisted out of the loop).
        wcomb = wcomb_ref[...]                                   # (L*H, L*G) bf16
        bcomb = jnp.broadcast_to(bcomb_ref[...], (BB, L * G))    # hoisted broadcast

        h = [h0_ref[layer] for layer in range(L)]                # each (BB, H) f32
        c = [c0_ref[layer] for layer in range(L)]

        # Wavefront: step s runs (layer l, time t=s-l) for all valid l simultaneously.
        for s in range(seq + L - 1):                             # static, fully unrolled
            h_cat = h[0] if L == 1 else jnp.concatenate(h, axis=-1)   # (BB, L*H)
            gates_all = jnp.dot(h_cat.astype(bf16), wcomb,
                                preferred_element_type=f32) + bcomb   # (BB, L*G)
            for layer in range(L):
                t = s - layer
                if t < 0 or t >= seq:
                    continue                                     # boundary of the wavefront
                g = gates_all[:, layer * G:(layer + 1) * G]      # (BB, G)
                if layer == 0:
                    g = g + xw_ref[t * BB:(t + 1) * BB, :]
                # One full-vreg sigmoid over all 4H=128 gate lanes (i, f, o reused from
                # the same pass); tanh only on the g slice.
                sg = jax.nn.sigmoid(g)
                tg = jnp.tanh(g[:, 2 * H:3 * H])
                c[layer] = sg[:, H:2 * H] * c[layer] + sg[:, 0:H] * tg
                h[layer] = sg[:, 3 * H:4 * H] * jnp.tanh(c[layer])
                if layer == L - 1:                               # final-layer activation
                    act_ref[t * BB:(t + 1) * BB, :] = h[layer]

        # Packed, lane-dense state output: [h_0 | ... | h_{L-1} | c_0 | ... | c_{L-1}].
        st_ref[...] = jnp.concatenate(h + c, axis=-1)            # (BB, 2*L*H)

        # FC head on all (seq*BB) final-layer activations with two big matmuls.
        act = act_ref[...]                                       # rows ordered t*BB+b
        mid = jnp.dot(act.astype(bf16), w1_ref[...],
                      preferred_element_type=f32) + b1_ref[...]
        mid = jnp.maximum(mid, 0.0)
        out = jnp.dot(mid.astype(bf16), w2_ref[...],
                      preferred_element_type=f32) + b2_ref[...]  # (seq*BB, input_size)
        # Re-pack to batch-major, lane-dense (BB, seq*input_size) and store unmasked.
        fc_ref[...] = jnp.concatenate(
            [out[t * BB:(t + 1) * BB, :] for t in range(seq)], axis=-1)

    return kernel


# ------------------------------------------------------------------ params

def init_params(key, input_size, hidden_size, lstm_layers, fc_hidden_dim):
    """Uniform(-1/sqrt(fan), 1/sqrt(fan)) init mimicking torch defaults."""
    params = {"lstm": [], "fc": None}
    bound = 1.0 / float(np.sqrt(hidden_size))

    def u(kk, shape, b):
        return jax.random.uniform(kk, shape, jnp.float32, minval=-b, maxval=b)

    for layer in range(lstm_layers):
        in_dim = input_size if layer == 0 else hidden_size
        key, k1, k2, k3, k4 = jax.random.split(key, 5)
        w_ih = u(k1, (in_dim, 4 * hidden_size), bound)        # transposed vs torch
        w_hh = u(k2, (hidden_size, 4 * hidden_size), bound)   # transposed vs torch
        b = u(k3, (1, 4 * hidden_size), bound) + u(k4, (1, 4 * hidden_size), bound)
        params["lstm"].append((w_ih, w_hh, b))

    bnd1 = 1.0 / float(np.sqrt(hidden_size))
    bnd2 = 1.0 / float(np.sqrt(fc_hidden_dim))
    key, k1, k2, k3, k4 = jax.random.split(key, 5)
    w1 = u(k1, (hidden_size, fc_hidden_dim), bnd1)
    bb1 = u(k2, (1, fc_hidden_dim), bnd1)
    w2 = u(k3, (fc_hidden_dim, input_size), bnd2)
    bb2 = u(k4, (1, input_size), bnd2)
    params["fc"] = (w1, bb1, w2, bb2)
    return params


# ------------------------------------------------------------------ forward

@jax.jit
def lstm_model_forward(x, h0, c0, params):
    """Equivalent of LSTMModel.forward.

    x:  (batch, seq, input_size)  batch_first
    h0, c0: (lstm_layers, batch, hidden)
    returns: fcl_out (batch*seq, input_size), (h_n, c_n)
    """
    batch, seq, input_size = x.shape
    L, _, H = h0.shape
    G = 4 * H
    fc_hidden = params["fc"][0].shape[1]
    bf16 = jnp.bfloat16

    BB, nblk = _pick_batch_block(batch)
    pb = BB * nblk
    if pb != batch:
        # Padded batch rows (zeros) compute throwaway states; they are sliced off below
        # and never reduced over, so the garbage in those rows is benign.
        x = jnp.pad(x, ((0, pb - batch), (0, 0), (0, 0)))
        h0 = jnp.pad(h0, ((0, 0), (0, pb - batch), (0, 0)))
        c0 = jnp.pad(c0, ((0, 0), (0, pb - batch), (0, 0)))

    x_tm = jnp.transpose(x.astype(jnp.float32), (1, 0, 2))       # (seq, pb, input) small

    # Block-bidiagonal combined recurrent/inter-layer weight:
    #   block (l, l)   = W_hh_l   (recurrence)
    #   block (l-1, l) = W_ih_l   (input from the layer below), l >= 1
    w_comb = jnp.zeros((L * H, L * G), jnp.float32)
    b_parts = []
    for layer, (w_ih, w_hh, b) in enumerate(params["lstm"]):
        w_comb = w_comb.at[layer * H:(layer + 1) * H, layer * G:(layer + 1) * G].set(w_hh)
        if layer > 0:
            w_comb = w_comb.at[(layer - 1) * H:layer * H, layer * G:(layer + 1) * G].set(w_ih)
        b_parts.append(b)
    b_comb = jnp.concatenate(b_parts, axis=-1)                   # (1, L*G)
    w_ih0 = params["lstm"][0][0]                                 # (input_size, G)
    w1, b1, w2, b2 = params["fc"]

    kernel = make_lstm_mlp_kernel(L, seq, BB, H, input_size, fc_hidden)

    fc_slab, state_slab = pl.pallas_call(
        kernel,
        out_shape=(
            jax.ShapeDtypeStruct((pb, seq * input_size), jnp.float32),
            jax.ShapeDtypeStruct((pb, 2 * L * H), jnp.float32),
        ),
        grid=(nblk,),
        in_specs=[
            pl.BlockSpec((seq, BB, input_size), lambda i: (0, i, 0)),
            pl.BlockSpec((L, BB, H), lambda i: (0, i, 0)),
            pl.BlockSpec((L, BB, H), lambda i: (0, i, 0)),
            pl.BlockSpec((input_size, G), lambda i: (0, 0)),
            pl.BlockSpec((L * H, L * G), lambda i: (0, 0)),
            pl.BlockSpec((1, L * G), lambda i: (0, 0)),
            pl.BlockSpec((H, fc_hidden), lambda i: (0, 0)),
            pl.BlockSpec((1, fc_hidden), lambda i: (0, 0)),
            pl.BlockSpec((fc_hidden, input_size), lambda i: (0, 0)),
            pl.BlockSpec((1, input_size), lambda i: (0, 0)),
        ],
        out_specs=(
            pl.BlockSpec((BB, seq * input_size), lambda i: (i, 0)),
            pl.BlockSpec((BB, 2 * L * H), lambda i: (i, 0)),
        ),
        scratch_shapes=[
            pltpu.VMEM((seq * BB, G), jnp.float32),              # hoisted x @ W_ih_0
            pltpu.VMEM((seq * BB, H), jnp.float32),              # final-layer activations
        ],
        compiler_params=pltpu.CompilerParams(
            dimension_semantics=("parallel",),   # independent batch blocks -> v7x 2 TCs
            vmem_limit_bytes=32 * 1024 * 1024,
        ),
    )(
        x_tm, h0, c0,
        w_ih0.astype(bf16), w_comb.astype(bf16), b_comb,
        w1.astype(bf16), b1, w2.astype(bf16), b2,
    )

    # Unpack the lane-dense slabs (tiny wrapper-side reshapes only).
    fcl_out = fc_slab[:batch].reshape(batch * seq, input_size)   # rows ordered b*seq+t
    state = state_slab[:batch]
    h_n = state[:, :L * H].reshape(batch, L, H).transpose(1, 0, 2)
    c_n = state[:, L * H:].reshape(batch, L, H).transpose(1, 0, 2)
    return fcl_out, (h_n, c_n)


# ------------------------------------------------------------------ pure-JAX reference

def reference_forward(x, h0, c0, params):
    batch, seq, input_size = x.shape
    num_layers, _, hidden = h0.shape
    h = [h0[l] for l in range(num_layers)]
    c = [c0[l] for l in range(num_layers)]
    outs = []
    for t in range(seq):
        inp = x[:, t, :]
        for l in range(num_layers):
            w_ih, w_hh, b = params["lstm"][l]
            g = inp @ w_ih + h[l] @ w_hh + b
            i_g = jax.nn.sigmoid(g[:, :hidden])
            f_g = jax.nn.sigmoid(g[:, hidden:2 * hidden])
            g_g = jnp.tanh(g[:, 2 * hidden:3 * hidden])
            o_g = jax.nn.sigmoid(g[:, 3 * hidden:])
            c[l] = f_g * c[l] + i_g * g_g
            h[l] = o_g * jnp.tanh(c[l])
            inp = h[l]
        outs.append(h[-1])
    out = jnp.stack(outs, axis=1).reshape(batch * seq, hidden)
    w1, b1, w2, b2 = params["fc"]
    fcl = jnp.maximum(out @ w1 + b1, 0.0) @ w2 + b2
    return fcl, (jnp.stack(h, 0), jnp.stack(c, 0))


# ------------------------------------------------------------------ main

if __name__ == "__main__":
    input_size = 16
    hidden_size = 32
    lstm_layers = 2
    fc_hidden_dim = 64
    batch = 2
    seq = 8

    key = jax.random.PRNGKey(0)
    key, kx = jax.random.split(key)
    x = jax.random.normal(kx, (batch, seq, input_size), dtype=jnp.float32)
    h0 = jnp.zeros((lstm_layers, batch, hidden_size), jnp.float32)   # init_hidden
    c0 = jnp.zeros((lstm_layers, batch, hidden_size), jnp.float32)

    params = init_params(key, input_size, hidden_size, lstm_layers, fc_hidden_dim)

    fcl_out, (h_n, c_n) = lstm_model_forward(x, h0, c0, params)
    jax.block_until_ready((fcl_out, h_n, c_n))

    assert fcl_out.shape == (batch * seq, input_size), fcl_out.shape
    assert h_n.shape == (lstm_layers, batch, hidden_size), h_n.shape
    assert c_n.shape == (lstm_layers, batch, hidden_size), c_n.shape

    # Kernel uses bf16 matmul operands with f32 accumulation; 2e-2 is the
    # bf16-appropriate tolerance against the all-f32 reference.
    ref_fc, (ref_h, ref_c) = reference_forward(x, h0, c0, params)
    np.testing.assert_allclose(np.asarray(fcl_out), np.asarray(ref_fc), rtol=2e-2, atol=2e-2)
    np.testing.assert_allclose(np.asarray(h_n), np.asarray(ref_h), rtol=2e-2, atol=2e-2)
    np.testing.assert_allclose(np.asarray(c_n), np.asarray(ref_c), rtol=2e-2, atol=2e-2)

    print("KERNEL_OK")
</pallas_src>

<mosaic_0001>
module attributes {stable_mosaic.version = 11 : i64} {
  func.func @kernel(%arg0: i32, %arg1: memref<8x8x16xf32, #tpu.memory_space<vmem>>, %arg2: memref<2x8x32xf32, #tpu.memory_space<vmem>>, %arg3: memref<2x8x32xf32, #tpu.memory_space<vmem>>, %arg4: memref<16x128xbf16, #tpu.memory_space<vmem>>, %arg5: memref<64x256xbf16, #tpu.memory_space<vmem>>, %arg6: memref<1x256xf32, #tpu.memory_space<vmem>>, %arg7: memref<32x64xbf16, #tpu.memory_space<vmem>>, %arg8: memref<1x64xf32, #tpu.memory_space<vmem>>, %arg9: memref<64x16xbf16, #tpu.memory_space<vmem>>, %arg10: memref<1x16xf32, #tpu.memory_space<vmem>>, %arg11: memref<8x128xf32, #tpu.memory_space<vmem>>, %arg12: memref<8x128xf32, #tpu.memory_space<vmem>>, %arg13: memref<64x128xf32, #tpu.memory_space<vmem>>, %arg14: memref<64x32xf32, #tpu.memory_space<vmem>>) attributes {dimension_semantics = [#tpu.dimension_semantics<parallel>], iteration_bounds = array<i64: 1>, scalar_prefetch = 0 : i64, scratch_operands = 2 : i64, tpu.core_type = #tpu.core_type<tc>, window_params = [{transform_indices = @transform_0, window_bounds = array<i64: 8, 8, 16>}, {transform_indices = @transform_1, window_bounds = array<i64: 2, 8, 32>}, {transform_indices = @transform_2, window_bounds = array<i64: 2, 8, 32>}, {pipeline_mode = #tpu.pipeline_mode<synchronous>, transform_indices = @transform_3, window_bounds = array<i64: 16, 128>}, {pipeline_mode = #tpu.pipeline_mode<synchronous>, transform_indices = @transform_4, window_bounds = array<i64: 64, 256>}, {pipeline_mode = #tpu.pipeline_mode<synchronous>, transform_indices = @transform_5, window_bounds = array<i64: 1, 256>}, {pipeline_mode = #tpu.pipeline_mode<synchronous>, transform_indices = @transform_6, window_bounds = array<i64: 32, 64>}, {pipeline_mode = #tpu.pipeline_mode<synchronous>, transform_indices = @transform_7, window_bounds = array<i64: 1, 64>}, {pipeline_mode = #tpu.pipeline_mode<synchronous>, transform_indices = @transform_8, window_bounds = array<i64: 64, 16>}, {pipeline_mode = #tpu.pipeline_mode<synchronous>, transform_indices = @transform_9, window_bounds = array<i64: 1, 16>}, {transform_indices = @transform_10, window_bounds = array<i64: 8, 128>}, {transform_indices = @transform_11, window_bounds = array<i64: 8, 128>}]} {
    %c0 = arith.constant 0 : index
    %c0_0 = arith.constant 0 : index
    %c0_1 = arith.constant 0 : index
    %0 = vector.load %arg1[%c0, %c0_0, %c0_1] : memref<8x8x16xf32, #tpu.memory_space<vmem>>, vector<8x8x16xf32>
    %1 = vector.shape_cast %0 : vector<8x8x16xf32> to vector<64x16xf32>
    %2 = arith.truncf %1 : vector<64x16xf32> to vector<64x16xbf16>
    %c0_2 = arith.constant 0 : index
    %c0_3 = arith.constant 0 : index
    %3 = vector.load %arg4[%c0_2, %c0_3] : memref<16x128xbf16, #tpu.memory_space<vmem>>, vector<16x128xbf16>
    %cst = arith.constant dense<0.000000e+00> : vector<64x128xf32>
    %4 = tpu.matmul %2, %3, %cst {dimension_numbers = #tpu.dot_dimension_numbers<[1], [0], [0], [1], [0, 0, 1, 1], [], []>} : vector<64x16xbf16>, vector<16x128xbf16>, vector<64x128xf32> -> vector<64x128xf32>
    %c0_4 = arith.constant 0 : index
    %c0_5 = arith.constant 0 : index
    %5 = vector.load %arg13[%c0_4, %c0_5] : memref<64x128xf32, #tpu.memory_space<vmem>>, vector<64x128xf32>
    tpu.vector_store %arg13[%c0_4, %c0_5], %4 {strides = array<i32>} : memref<64x128xf32, #tpu.memory_space<vmem>>, vector<64x128xf32>,
    %c0_6 = arith.constant 0 : index
    %c0_7 = arith.constant 0 : index
    %6 = vector.load %arg5[%c0_6, %c0_7] : memref<64x256xbf16, #tpu.memory_space<vmem>>, vector<64x256xbf16>
    %c0_8 = arith.constant 0 : index
    %c0_9 = arith.constant 0 : index
    %7 = vector.load %arg6[%c0_8, %c0_9] : memref<1x256xf32, #tpu.memory_space<vmem>>, vector<1x256xf32>
    %8 = vector.shape_cast %7 : vector<1x256xf32> to vector<1x256xf32>
    %9 = vector.broadcast %8 : vector<1x256xf32> to vector<8x256xf32>
    %c0_10 = arith.constant 0 : index
    %c0_11 = arith.constant 0 : index
    %c0_12 = arith.constant 0 : index
    %10 = vector.load %arg2[%c0_10, %c0_11, %c0_12] : memref<2x8x32xf32, #tpu.memory_space<vmem>>, vector<1x8x32xf32>
    %11 = vector.shape_cast %10 : vector<1x8x32xf32> to vector<8x32xf32>
    %c1 = arith.constant 1 : index
    %c0_13 = arith.constant 0 : index
    %c0_14 = arith.constant 0 : index
    %12 = vector.load %arg2[%c1, %c0_13, %c0_14] : memref<2x8x32xf32, #tpu.memory_space<vmem>>, vector<1x8x32xf32>
    %13 = vector.shape_cast %12 : vector<1x8x32xf32> to vector<8x32xf32>
    %c0_15 = arith.constant 0 : index
    %c0_16 = arith.constant 0 : index
    %c0_17 = arith.constant 0 : index
    %14 = vector.load %arg3[%c0_15, %c0_16, %c0_17] : memref<2x8x32xf32, #tpu.memory_space<vmem>>, vector<1x8x32xf32>
    %15 = vector.shape_cast %14 : vector<1x8x32xf32> to vector<8x32xf32>
    %c1_18 = arith.constant 1 : index
    %c0_19 = arith.constant 0 : index
    %c0_20 = arith.constant 0 : index
    %16 = vector.load %arg3[%c1_18, %c0_19, %c0_20] : memref<2x8x32xf32, #tpu.memory_space<vmem>>, vector<1x8x32xf32>
    %17 = vector.shape_cast %16 : vector<1x8x32xf32> to vector<8x32xf32>
    %18 = tpu.concatenate %11, %13 in 1 : vector<8x32xf32>, vector<8x32xf32> -> vector<8x64xf32>
    %19 = arith.truncf %18 : vector<8x64xf32> to vector<8x64xbf16>
    %cst_21 = arith.constant dense<0.000000e+00> : vector<8x256xf32>
    %20 = tpu.matmul %19, %6, %cst_21 {dimension_numbers = #tpu.dot_dimension_numbers<[1], [0], [0], [1], [0, 0, 1, 1], [], []>} : vector<8x64xbf16>, vector<64x256xbf16>, vector<8x256xf32> -> vector<8x256xf32>
    %21 = arith.addf %20, %9 : vector<8x256xf32>
    %22 = vector.extract_strided_slice %21 {offsets = [0, 0], sizes = [8, 128], strides = [1, 1]} : vector<8x256xf32> to vector<8x128xf32>
    %c0_22 = arith.constant 0 : index
    %c0_23 = arith.constant 0 : index
    %23 = vector.load %arg13[%c0_22, %c0_23] : memref<64x128xf32, #tpu.memory_space<vmem>>, vector<8x128xf32>
    %24 = arith.addf %22, %23 : vector<8x128xf32>
    %25 = arith.negf %24 : vector<8x128xf32>
    %26 = math.exp %25 : vector<8x128xf32>
    %cst_24 = arith.constant 1.000000e+00 : f32
    %27 = vector.broadcast %cst_24 : f32 to vector<8x128xf32>
    %28 = arith.addf %27, %26 : vector<8x128xf32>
    %29 = arith.divf %27, %28 : vector<8x128xf32>
    %30 = vector.extract_strided_slice %24 {offsets = [0, 64], sizes = [8, 32], strides = [1, 1]} : vector<8x128xf32> to vector<8x32xf32>
    %31 = math.tanh %30 : vector<8x32xf32>
    %32 = vector.extract_strided_slice %29 {offsets = [0, 32], sizes = [8, 32], strides = [1, 1]} : vector<8x128xf32> to vector<8x32xf32>
    %33 = arith.mulf %32, %15 : vector<8x32xf32>
    %34 = vector.extract_strided_slice %29 {offsets = [0, 0], sizes = [8, 32], strides = [1, 1]} : vector<8x128xf32> to vector<8x32xf32>
    %35 = arith.mulf %34, %31 : vector<8x32xf32>
    %36 = arith.addf %33, %35 : vector<8x32xf32>
    %37 = vector.extract_strided_slice %29 {offsets = [0, 96], sizes = [8, 32], strides = [1, 1]} : vector<8x128xf32> to vector<8x32xf32>
    %38 = math.tanh %36 : vector<8x32xf32>
    %39 = arith.mulf %37, %38 : vector<8x32xf32>
    %40 = tpu.concatenate %39, %13 in 1 : vector<8x32xf32>, vector<8x32xf32> -> vector<8x64xf32>
    %41 = arith.truncf %40 : vector<8x64xf32> to vector<8x64xbf16>
    %cst_25 = arith.constant dense<0.000000e+00> : vector<8x256xf32>
    %42 = tpu.matmul %41, %6, %cst_25 {dimension_numbers = #tpu.dot_dimension_numbers<[1], [0], [0], [1], [0, 0, 1, 1], [], []>} : vector<8x64xbf16>, vector<64x256xbf16>, vector<8x256xf32> -> vector<8x256xf32>
    %43 = arith.addf %42, %9 : vector<8x256xf32>
    %44 = vector.extract_strided_slice %43 {offsets = [0, 0], sizes = [8, 128], strides = [1, 1]} : vector<8x256xf32> to vector<8x128xf32>
    %c8 = arith.constant 8 : index
    %c0_26 = arith.constant 0 : index
    %45 = vector.load %arg13[%c8, %c0_26] : memref<64x128xf32, #tpu.memory_space<vmem>>, vector<8x128xf32>
    %46 = arith.addf %44, %45 : vector<8x128xf32>
    %47 = arith.negf %46 : vector<8x128xf32>
    %48 = math.exp %47 : vector<8x128xf32>
    %cst_27 = arith.constant 1.000000e+00 : f32
    %49 = vector.broadcast %cst_27 : f32 to vector<8x128xf32>
    %50 = arith.addf %49, %48 : vector<8x128xf32>
    %51 = arith.divf %49, %50 : vector<8x128xf32>
    %52 = vector.extract_strided_slice %46 {offsets = [0, 64], sizes = [8, 32], strides = [1, 1]} : vector<8x128xf32> to vector<8x32xf32>
    %53 = math.tanh %52 : vector<8x32xf32>
    %54 = vector.extract_strided_slice %51 {offsets = [0, 32], sizes = [8, 32], strides = [1, 1]} : vector<8x128xf32> to vector<8x32xf32>
    %55 = arith.mulf %54, %36 : vector<8x32xf32>
    %56 = vector.extract_strided_slice %51 {offsets = [0, 0], sizes = [8, 32], strides = [1, 1]} : vector<8x128xf32> to vector<8x32xf32>
    %57 = arith.mulf %56, %53 : vector<8x32xf32>
    %58 = arith.addf %55, %57 : vector<8x32xf32>
    %59 = vector.extract_strided_slice %51 {offsets = [0, 96], sizes = [8, 32], strides = [1, 1]} : vector<8x128xf32> to vector<8x32xf32>
    %60 = math.tanh %58 : vector<8x32xf32>
    %61 = arith.mulf %59, %60 : vector<8x32xf32>
    %62 = vector.extract_strided_slice %43 {offsets = [0, 128], sizes = [8, 128], strides = [1, 1]} : vector<8x256xf32> to vector<8x128xf32>
    %63 = arith.negf %62 : vector<8x128xf32>
    %64 = math.exp %63 : vector<8x128xf32>
    %cst_28 = arith.constant 1.000000e+00 : f32
    %65 = vector.broadcast %cst_28 : f32 to vector<8x128xf32>
    %66 = arith.addf %65, %64 : vector<8x128xf32>
    %67 = arith.divf %65, %66 : vector<8x128xf32>
    %68 = vector.extract_strided_slice %62 {offsets = [0, 64], sizes = [8, 32], strides = [1, 1]} : vector<8x128xf32> to vector<8x32xf32>
    %69 = math.tanh %68 : vector<8x32xf32>
    %70 = vector.extract_strided_slice %67 {offsets = [0, 32], sizes = [8, 32], strides = [1, 1]} : vector<8x128xf32> to vector<8x32xf32>
    %71 = arith.mulf %70, %17 : vector<8x32xf32>
    %72 = vector.extract_strided_slice %67 {offsets = [0, 0], sizes = [8, 32], strides = [1, 1]} : vector<8x128xf32> to vector<8x32xf32>
    %73 = arith.mulf %72, %69 : vector<8x32xf32>
    %74 = arith.addf %71, %73 : vector<8x32xf32>
    %75 = vector.extract_strided_slice %67 {offsets = [0, 96], sizes = [8, 32], strides = [1, 1]} : vector<8x128xf32> to vector<8x32xf32>
    %76 = math.tanh %74 : vector<8x32xf32>
    %77 = arith.mulf %75, %76 : vector<8x32xf32>
    %c0_29 = arith.constant 0 : index
    %c0_30 = arith.constant 0 : index
    %78 = vector.load %arg14[%c0_29, %c0_30] : memref<64x32xf32, #tpu.memory_space<vmem>>, vector<8x32xf32>
    tpu.vector_store %arg14[%c0_29, %c0_30], %77 {strides = array<i32>} : memref<64x32xf32, #tpu.memory_space<vmem>>, vector<8x32xf32>,
    %79 = tpu.concatenate %61, %77 in 1 : vector<8x32xf32>, vector<8x32xf32> -> vector<8x64xf32>
    %80 = arith.truncf %79 : vector<8x64xf32> to vector<8x64xbf16>
    %cst_31 = arith.constant dense<0.000000e+00> : vector<8x256xf32>
    %81 = tpu.matmul %80, %6, %cst_31 {dimension_numbers = #tpu.dot_dimension_numbers<[1], [0], [0], [1], [0, 0, 1, 1], [], []>} : vector<8x64xbf16>, vector<64x256xbf16>, vector<8x256xf32> -> vector<8x256xf32>
    %82 = arith.addf %81, %9 : vector<8x256xf32>
    %83 = vector.extract_strided_slice %82 {offsets = [0, 0], sizes = [8, 128], strides = [1, 1]} : vector<8x256xf32> to vector<8x128xf32>
    %c16 = arith.constant 16 : index
    %c0_32 = arith.constant 0 : index
    %84 = vector.load %arg13[%c16, %c0_32] : memref<64x128xf32, #tpu.memory_space<vmem>>, vector<8x128xf32>
    %85 = arith.addf %83, %84 : vector<8x128xf32>
    %86 = arith.negf %85 : vector<8x128xf32>
    %87 = math.exp %86 : vector<8x128xf32>
    %cst_33 = arith.constant 1.000000e+00 : f32
    %88 = vector.broadcast %cst_33 : f32 to vector<8x128xf32>
    %89 = arith.addf %88, %87 : vector<8x128xf32>
    %90 = arith.divf %88, %89 : vector<8x128xf32>
    %91 = vector.extract_strided_slice %85 {offsets = [0, 64], sizes = [8, 32], strides = [1, 1]} : vector<8x128xf32> to vector<8x32xf32>
    %92 = math.tanh %91 : vector<8x32xf32>
    %93 = vector.extract_strided_slice %90 {offsets = [0, 32], sizes = [8, 32], strides = [1, 1]} : vector<8x128xf32> to vector<8x32xf32>
    %94 = arith.mulf %93, %58 : vector<8x32xf32>
    %95 = vector.extract_strided_slice %90 {offsets = [0, 0], sizes = [8, 32], strides = [1, 1]} : vector<8x128xf32> to vector<8x32xf32>
    %96 = arith.mulf %95, %92 : vector<8x32xf32>
    %97 = arith.addf %94, %96 : vector<8x32xf32>
    %98 = vector.extract_strided_slice %90 {offsets = [0, 96], sizes = [8, 32], strides = [1, 1]} : vector<8x128xf32> to vector<8x32xf32>
    %99 = math.tanh %97 : vector<8x32xf32>
    %100 = arith.mulf %98, %99 : vector<8x32xf32>
    %101 = vector.extract_strided_slice %82 {offsets = [0, 128], sizes = [8, 128], strides = [1, 1]} : vector<8x256xf32> to vector<8x128xf32>
    %102 = arith.negf %101 : vector<8x128xf32>
    %103 = math.exp %102 : vector<8x128xf32>
    %cst_34 = arith.constant 1.000000e+00 : f32
    %104 = vector.broadcast %cst_34 : f32 to vector<8x128xf32>
    %105 = arith.addf %104, %103 : vector<8x128xf32>
    %106 = arith.divf %104, %105 : vector<8x128xf32>
    %107 = vector.extract_strided_slice %101 {offsets = [0, 64], sizes = [8, 32], strides = [1, 1]} : vector<8x128xf32> to vector<8x32xf32>
    %108 = math.tanh %107 : vector<8x32xf32>
    %109 = vector.extract_strided_slice %106 {offsets = [0, 32], sizes = [8, 32], strides = [1, 1]} : vector<8x128xf32> to vector<8x32xf32>
    %110 = arith.mulf %109, %74 : vector<8x32xf32>
    %111 = vector.extract_strided_slice %106 {offsets = [0, 0], sizes = [8, 32], strides = [1, 1]} : vector<8x128xf32> to vector<8x32xf32>
    %112 = arith.mulf %111, %108 : vector<8x32xf32>
    %113 = arith.addf %110, %112 : vector<8x32xf32>
    %114 = vector.extract_strided_slice %106 {offsets = [0, 96], sizes = [8, 32], strides = [1, 1]} : vector<8x128xf32> to vector<8x32xf32>
    %115 = math.tanh %113 : vector<8x32xf32>
    %116 = arith.mulf %114, %115 : vector<8x32xf32>
    %c8_35 = arith.constant 8 : index
    %c0_36 = arith.constant 0 : index
    %117 = vector.load %arg14[%c8_35, %c0_36] : memref<64x32xf32, #tpu.memory_space<vmem>>, vector<8x32xf32>
    tpu.vector_store %arg14[%c8_35, %c0_36], %116 {strides = array<i32>} : memref<64x32xf32, #tpu.memory_space<vmem>>, vector<8x32xf32>,
    %118 = tpu.concatenate %100, %116 in 1 : vector<8x32xf32>, vector<8x32xf32> -> vector<8x64xf32>
    %119 = arith.truncf %118 : vector<8x64xf32> to vector<8x64xbf16>
    %cst_37 = arith.constant dense<0.000000e+00> : vector<8x256xf32>
    %120 = tpu.matmul %119, %6, %cst_37 {dimension_numbers = #tpu.dot_dimension_numbers<[1], [0], [0], [1], [0, 0, 1, 1], [], []>} : vector<8x64xbf16>, vector<64x256xbf16>, vector<8x256xf32> -> vector<8x256xf32>
    %121 = arith.addf %120, %9 : vector<8x256xf32>
    %122 = vector.extract_strided_slice %121 {offsets = [0, 0], sizes = [8, 128], strides = [1, 1]} : vector<8x256xf32> to vector<8x128xf32>
    %c24 = arith.constant 24 : index
    %c0_38 = arith.constant 0 : index
    %123 = vector.load %arg13[%c24, %c0_38] : memref<64x128xf32, #tpu.memory_space<vmem>>, vector<8x128xf32>
    %124 = arith.addf %122, %123 : vector<8x128xf32>
    %125 = arith.negf %124 : vector<8x128xf32>
    %126 = math.exp %125 : vector<8x128xf32>
    %cst_39 = arith.constant 1.000000e+00 : f32
    %127 = vector.broadcast %cst_39 : f32 to vector<8x128xf32>
    %128 = arith.addf %127, %126 : vector<8x128xf32>
    %129 = arith.divf %127, %128 : vector<8x128xf32>
    %130 = vector.extract_strided_slice %124 {offsets = [0, 64], sizes = [8, 32], strides = [1, 1]} : vector<8x128xf32> to vector<8x32xf32>
    %131 = math.tanh %130 : vector<8x32xf32>
    %132 = vector.extract_strided_slice %129 {offsets = [0, 32], sizes = [8, 32], strides = [1, 1]} : vector<8x128xf32> to vector<8x32xf32>
    %133 = arith.mulf %132, %97 : vector<8x32xf32>
    %134 = vector.extract_strided_slice %129 {offsets = [0, 0], sizes = [8, 32], strides = [1, 1]} : vector<8x128xf32> to vector<8x32xf32>
    %135 = arith.mulf %134, %131 : vector<8x32xf32>
    %136 = arith.addf %133, %135 : vector<8x32xf32>
    %137 = vector.extract_strided_slice %129 {offsets = [0, 96], sizes = [8, 32], strides = [1, 1]} : vector<8x128xf32> to vector<8x32xf32>
    %138 = math.tanh %136 : vector<8x32xf32>
    %139 = arith.mulf %137, %138 : vector<8x32xf32>
    %140 = vector.extract_strided_slice %121 {offsets = [0, 128], sizes = [8, 128], strides = [1, 1]} : vector<8x256xf32> to vector<8x128xf32>
    %141 = arith.negf %140 : vector<8x128xf32>
    %142 = math.exp %141 : vector<8x128xf32>
    %cst_40 = arith.constant 1.000000e+00 : f32
    %143 = vector.broadcast %cst_40 : f32 to vector<8x128xf32>
    %144 = arith.addf %143, %142 : vector<8x128xf32>
    %145 = arith.divf %143, %144 : vector<8x128xf32>
    %146 = vector.extract_strided_slice %140 {offsets = [0, 64], sizes = [8, 32], strides = [1, 1]} : vector<8x128xf32> to vector<8x32xf32>
    %147 = math.tanh %146 : vector<8x32xf32>
    %148 = vector.extract_strided_slice %145 {offsets = [0, 32], sizes = [8, 32], strides = [1, 1]} : vector<8x128xf32> to vector<8x32xf32>
    %149 = arith.mulf %148, %113 : vector<8x32xf32>
    %150 = vector.extract_strided_slice %145 {offsets = [0, 0], sizes = [8, 32], strides = [1, 1]} : vector<8x128xf32> to vector<8x32xf32>
    %151 = arith.mulf %150, %147 : vector<8x32xf32>
    %152 = arith.addf %149, %151 : vector<8x32xf32>
    %153 = vector.extract_strided_slice %145 {offsets = [0, 96], sizes = [8, 32], strides = [1, 1]} : vector<8x128xf32> to vector<8x32xf32>
    %154 = math.tanh %152 : vector<8x32xf32>
    %155 = arith.mulf %153, %154 : vector<8x32xf32>
    %c16_41 = arith.constant 16 : index
    %c0_42 = arith.constant 0 : index
    %156 = vector.load %arg14[%c16_41, %c0_42] : memref<64x32xf32, #tpu.memory_space<vmem>>, vector<8x32xf32>
    tpu.vector_store %arg14[%c16_41, %c0_42], %155 {strides = array<i32>} : memref<64x32xf32, #tpu.memory_space<vmem>>, vector<8x32xf32>,
    %157 = tpu.concatenate %139, %155 in 1 : vector<8x32xf32>, vector<8x32xf32> -> vector<8x64xf32>
    %158 = arith.truncf %157 : vector<8x64xf32> to vector<8x64xbf16>
    %cst_43 = arith.constant dense<0.000000e+00> : vector<8x256xf32>
    %159 = tpu.matmul %158, %6, %cst_43 {dimension_numbers = #tpu.dot_dimension_numbers<[1], [0], [0], [1], [0, 0, 1, 1], [], []>} : vector<8x64xbf16>, vector<64x256xbf16>, vector<8x256xf32> -> vector<8x256xf32>
    %160 = arith.addf %159, %9 : vector<8x256xf32>
    %161 = vector.extract_strided_slice %160 {offsets = [0, 0], sizes = [8, 128], strides = [1, 1]} : vector<8x256xf32> to vector<8x128xf32>
    %c32 = arith.constant 32 : index
    %c0_44 = arith.constant 0 : index
    %162 = vector.load %arg13[%c32, %c0_44] : memref<64x128xf32, #tpu.memory_space<vmem>>, vector<8x128xf32>
    %163 = arith.addf %161, %162 : vector<8x128xf32>
    %164 = arith.negf %163 : vector<8x128xf32>
    %165 = math.exp %164 : vector<8x128xf32>
    %cst_45 = arith.constant 1.000000e+00 : f32
    %166 = vector.broadcast %cst_45 : f32 to vector<8x128xf32>
    %167 = arith.addf %166, %165 : vector<8x128xf32>
    %168 = arith.divf %166, %167 : vector<8x128xf32>
    %169 = vector.extract_strided_slice %163 {offsets = [0, 64], sizes = [8, 32], strides = [1, 1]} : vector<8x128xf32> to vector<8x32xf32>
    %170 = math.tanh %169 : vector<8x32xf32>
    %171 = vector.extract_strided_slice %168 {offsets = [0, 32], sizes = [8, 32], strides = [1, 1]} : vector<8x128xf32> to vector<8x32xf32>
    %172 = arith.mulf %171, %136 : vector<8x32xf32>
    %173 = vector.extract_strided_slice %168 {offsets = [0, 0], sizes = [8, 32], strides = [1, 1]} : vector<8x128xf32> to vector<8x32xf32>
    %174 = arith.mulf %173, %170 : vector<8x32xf32>
    %175 = arith.addf %172, %174 : vector<8x32xf32>
    %176 = vector.extract_strided_slice %168 {offsets = [0, 96], sizes = [8, 32], strides = [1, 1]} : vector<8x128xf32> to vector<8x32xf32>
    %177 = math.tanh %175 : vector<8x32xf32>
    %178 = arith.mulf %176, %177 : vector<8x32xf32>
    %179 = vector.extract_strided_slice %160 {offsets = [0, 128], sizes = [8, 128], strides = [1, 1]} : vector<8x256xf32> to vector<8x128xf32>
    %180 = arith.negf %179 : vector<8x128xf32>
    %181 = math.exp %180 : vector<8x128xf32>
    %cst_46 = arith.constant 1.000000e+00 : f32
    %182 = vector.broadcast %cst_46 : f32 to vector<8x128xf32>
    %183 = arith.addf %182, %181 : vector<8x128xf32>
    %184 = arith.divf %182, %183 : vector<8x128xf32>
    %185 = vector.extract_strided_slice %179 {offsets = [0, 64], sizes = [8, 32], strides = [1, 1]} : vector<8x128xf32> to vector<8x32xf32>
    %186 = math.tanh %185 : vector<8x32xf32>
    %187 = vector.extract_strided_slice %184 {offsets = [0, 32], sizes = [8, 32], strides = [1, 1]} : vector<8x128xf32> to vector<8x32xf32>
    %188 = arith.mulf %187, %152 : vector<8x32xf32>
    %189 = vector.extract_strided_slice %184 {offsets = [0, 0], sizes = [8, 32], strides = [1, 1]} : vector<8x128xf32> to vector<8x32xf32>
    %190 = arith.mulf %189, %186 : vector<8x32xf32>
    %191 = arith.addf %188, %190 : vector<8x32xf32>
    %192 = vector.extract_strided_slice %184 {offsets = [0, 96], sizes = [8, 32], strides = [1, 1]} : vector<8x128xf32> to vector<8x32xf32>
    %193 = math.tanh %191 : vector<8x32xf32>
    %194 = arith.mulf %192, %193 : vector<8x32xf32>
    %c24_47 = arith.constant 24 : index
    %c0_48 = arith.constant 0 : index
    %195 = vector.load %arg14[%c24_47, %c0_48] : memref<64x32xf32, #tpu.memory_space<vmem>>, vector<8x32xf32>
    tpu.vector_store %arg14[%c24_47, %c0_48], %194 {strides = array<i32>} : memref<64x32xf32, #tpu.memory_space<vmem>>, vector<8x32xf32>,
    %196 = tpu.concatenate %178, %194 in 1 : vector<8x32xf32>, vector<8x32xf32> -> vector<8x64xf32>
    %197 = arith.truncf %196 : vector<8x64xf32> to vector<8x64xbf16>
    %cst_49 = arith.constant dense<0.000000e+00> : vector<8x256xf32>
    %198 = tpu.matmul %197, %6, %cst_49 {dimension_numbers = #tpu.dot_dimension_numbers<[1], [0], [0], [1], [0, 0, 1, 1], [], []>} : vector<8x64xbf16>, vector<64x256xbf16>, vector<8x256xf32> -> vector<8x256xf32>
    %199 = arith.addf %198, %9 : vector<8x256xf32>
    %200 = vector.extract_strided_slice %199 {offsets = [0, 0], sizes = [8, 128], strides = [1, 1]} : vector<8x256xf32> to vector<8x128xf32>
    %c40 = arith.constant 40 : index
    %c0_50 = arith.constant 0 : index
    %201 = vector.load %arg13[%c40, %c0_50] : memref<64x128xf32, #tpu.memory_space<vmem>>, vector<8x128xf32>
    %202 = arith.addf %200, %201 : vector<8x128xf32>
    %203 = arith.negf %202 : vector<8x128xf32>
    %204 = math.exp %203 : vector<8x128xf32>
    %cst_51 = arith.constant 1.000000e+00 : f32
    %205 = vector.broadcast %cst_51 : f32 to vector<8x128xf32>
    %206 = arith.addf %205, %204 : vector<8x128xf32>
    %207 = arith.divf %205, %206 : vector<8x128xf32>
    %208 = vector.extract_strided_slice %202 {offsets = [0, 64], sizes = [8, 32], strides = [1, 1]} : vector<8x128xf32> to vector<8x32xf32>
    %209 = math.tanh %208 : vector<8x32xf32>
    %210 = vector.extract_strided_slice %207 {offsets = [0, 32], sizes = [8, 32], strides = [1, 1]} : vector<8x128xf32> to vector<8x32xf32>
    %211 = arith.mulf %210, %175 : vector<8x32xf32>
    %212 = vector.extract_strided_slice %207 {offsets = [0, 0], sizes = [8, 32], strides = [1, 1]} : vector<8x128xf32> to vector<8x32xf32>
    %213 = arith.mulf %212, %209 : vector<8x32xf32>
    %214 = arith.addf %211, %213 : vector<8x32xf32>
    %215 = vector.extract_strided_slice %207 {offsets = [0, 96], sizes = [8, 32], strides = [1, 1]} : vector<8x128xf32> to vector<8x32xf32>
    %216 = math.tanh %214 : vector<8x32xf32>
    %217 = arith.mulf %215, %216 : vector<8x32xf32>
    %218 = vector.extract_strided_slice %199 {offsets = [0, 128], sizes = [8, 128], strides = [1, 1]} : vector<8x256xf32> to vector<8x128xf32>
    %219 = arith.negf %218 : vector<8x128xf32>
    %220 = math.exp %219 : vector<8x128xf32>
    %cst_52 = arith.constant 1.000000e+00 : f32
    %221 = vector.broadcast %cst_52 : f32 to vector<8x128xf32>
    %222 = arith.addf %221, %220 : vector<8x128xf32>
    %223 = arith.divf %221, %222 : vector<8x128xf32>
    %224 = vector.extract_strided_slice %218 {offsets = [0, 64], sizes = [8, 32], strides = [1, 1]} : vector<8x128xf32> to vector<8x32xf32>
    %225 = math.tanh %224 : vector<8x32xf32>
    %226 = vector.extract_strided_slice %223 {offsets = [0, 32], sizes = [8, 32], strides = [1, 1]} : vector<8x128xf32> to vector<8x32xf32>
    %227 = arith.mulf %226, %191 : vector<8x32xf32>
    %228 = vector.extract_strided_slice %223 {offsets = [0, 0], sizes = [8, 32], strides = [1, 1]} : vector<8x128xf32> to vector<8x32xf32>
    %229 = arith.mulf %228, %225 : vector<8x32xf32>
    %230 = arith.addf %227, %229 : vector<8x32xf32>
    %231 = vector.extract_strided_slice %223 {offsets = [0, 96], sizes = [8, 32], strides = [1, 1]} : vector<8x128xf32> to vector<8x32xf32>
    %232 = math.tanh %230 : vector<8x32xf32>
    %233 = arith.mulf %231, %232 : vector<8x32xf32>
    %c32_53 = arith.constant 32 : index
    %c0_54 = arith.constant 0 : index
    %234 = vector.load %arg14[%c32_53, %c0_54] : memref<64x32xf32, #tpu.memory_space<vmem>>, vector<8x32xf32>
    tpu.vector_store %arg14[%c32_53, %c0_54], %233 {strides = array<i32>} : memref<64x32xf32, #tpu.memory_space<vmem>>, vector<8x32xf32>,
    %235 = tpu.concatenate %217, %233 in 1 : vector<8x32xf32>, vector<8x32xf32> -> vector<8x64xf32>
    %236 = arith.truncf %235 : vector<8x64xf32> to vector<8x64xbf16>
    %cst_55 = arith.constant dense<0.000000e+00> : vector<8x256xf32>
    %237 = tpu.matmul %236, %6, %cst_55 {dimension_numbers = #tpu.dot_dimension_numbers<[1], [0], [0], [1], [0, 0, 1, 1], [], []>} : vector<8x64xbf16>, vector<64x256xbf16>, vector<8x256xf32> -> vector<8x256xf32>
    %238 = arith.addf %237, %9 : vector<8x256xf32>
    %239 = vector.extract_strided_slice %238 {offsets = [0, 0], sizes = [8, 128], strides = [1, 1]} : vector<8x256xf32> to vector<8x128xf32>
    %c48 = arith.constant 48 : index
    %c0_56 = arith.constant 0 : index
    %240 = vector.load %arg13[%c48, %c0_56] : memref<64x128xf32, #tpu.memory_space<vmem>>, vector<8x128xf32>
    %241 = arith.addf %239, %240 : vector<8x128xf32>
    %242 = arith.negf %241 : vector<8x128xf32>
    %243 = math.exp %242 : vector<8x128xf32>
    %cst_57 = arith.constant 1.000000e+00 : f32
    %244 = vector.broadcast %cst_57 : f32 to vector<8x128xf32>
    %245 = arith.addf %244, %243 : vector<8x128xf32>
    %246 = arith.divf %244, %245 : vector<8x128xf32>
    %247 = vector.extract_strided_slice %241 {offsets = [0, 64], sizes = [8, 32], strides = [1, 1]} : vector<8x128xf32> to vector<8x32xf32>
    %248 = math.tanh %247 : vector<8x32xf32>
    %249 = vector.extract_strided_slice %246 {offsets = [0, 32], sizes = [8, 32], strides = [1, 1]} : vector<8x128xf32> to vector<8x32xf32>
    %250 = arith.mulf %249, %214 : vector<8x32xf32>
    %251 = vector.extract_strided_slice %246 {offsets = [0, 0], sizes = [8, 32], strides = [1, 1]} : vector<8x128xf32> to vector<8x32xf32>
    %252 = arith.mulf %251, %248 : vector<8x32xf32>
    %253 = arith.addf %250, %252 : vector<8x32xf32>
    %254 = vector.extract_strided_slice %246 {offsets = [0, 96], sizes = [8, 32], strides = [1, 1]} : vector<8x128xf32> to vector<8x32xf32>
    %255 = math.tanh %253 : vector<8x32xf32>
    %256 = arith.mulf %254, %255 : vector<8x32xf32>
    %257 = vector.extract_strided_slice %238 {offsets = [0, 128], sizes = [8, 128], strides = [1, 1]} : vector<8x256xf32> to vector<8x128xf32>
    %258 = arith.negf %257 : vector<8x128xf32>
    %259 = math.exp %258 : vector<8x128xf32>
    %cst_58 = arith.constant 1.000000e+00 : f32
    %260 = vector.broadcast %cst_58 : f32 to vector<8x128xf32>
    %261 = arith.addf %260, %259 : vector<8x128xf32>
    %262 = arith.divf %260, %261 : vector<8x128xf32>
    %263 = vector.extract_strided_slice %257 {offsets = [0, 64], sizes = [8, 32], strides = [1, 1]} : vector<8x128xf32> to vector<8x32xf32>
    %264 = math.tanh %263 : vector<8x32xf32>
    %265 = vector.extract_strided_slice %262 {offsets = [0, 32], sizes = [8, 32], strides = [1, 1]} : vector<8x128xf32> to vector<8x32xf32>
    %266 = arith.mulf %265, %230 : vector<8x32xf32>
    %267 = vector.extract_strided_slice %262 {offsets = [0, 0], sizes = [8, 32], strides = [1, 1]} : vector<8x128xf32> to vector<8x32xf32>
    %268 = arith.mulf %267, %264 : vector<8x32xf32>
    %269 = arith.addf %266, %268 : vector<8x32xf32>
    %270 = vector.extract_strided_slice %262 {offsets = [0, 96], sizes = [8, 32], strides = [1, 1]} : vector<8x128xf32> to vector<8x32xf32>
    %271 = math.tanh %269 : vector<8x32xf32>
    %272 = arith.mulf %270, %271 : vector<8x32xf32>
    %c40_59 = arith.constant 40 : index
    %c0_60 = arith.constant 0 : index
    %273 = vector.load %arg14[%c40_59, %c0_60] : memref<64x32xf32, #tpu.memory_space<vmem>>, vector<8x32xf32>
    tpu.vector_store %arg14[%c40_59, %c0_60], %272 {strides = array<i32>} : memref<64x32xf32, #tpu.memory_space<vmem>>, vector<8x32xf32>,
    %274 = tpu.concatenate %256, %272 in 1 : vector<8x32xf32>, vector<8x32xf32> -> vector<8x64xf32>
    %275 = arith.truncf %274 : vector<8x64xf32> to vector<8x64xbf16>
    %cst_61 = arith.constant dense<0.000000e+00> : vector<8x256xf32>
    %276 = tpu.matmul %275, %6, %cst_61 {dimension_numbers = #tpu.dot_dimension_numbers<[1], [0], [0], [1], [0, 0, 1, 1], [], []>} : vector<8x64xbf16>, vector<64x256xbf16>, vector<8x256xf32> -> vector<8x256xf32>
    %277 = arith.addf %276, %9 : vector<8x256xf32>
    %278 = vector.extract_strided_slice %277 {offsets = [0, 0], sizes = [8, 128], strides = [1, 1]} : vector<8x256xf32> to vector<8x128xf32>
    %c56 = arith.constant 56 : index
    %c0_62 = arith.constant 0 : index
    %279 = vector.load %arg13[%c56, %c0_62] : memref<64x128xf32, #tpu.memory_space<vmem>>, vector<8x128xf32>
    %280 = arith.addf %278, %279 : vector<8x128xf32>
    %281 = arith.negf %280 : vector<8x128xf32>
    %282 = math.exp %281 : vector<8x128xf32>
    %cst_63 = arith.constant 1.000000e+00 : f32
    %283 = vector.broadcast %cst_63 : f32 to vector<8x128xf32>
    %284 = arith.addf %283, %282 : vector<8x128xf32>
    %285 = arith.divf %283, %284 : vector<8x128xf32>
    %286 = vector.extract_strided_slice %280 {offsets = [0, 64], sizes = [8, 32], strides = [1, 1]} : vector<8x128xf32> to vector<8x32xf32>
    %287 = math.tanh %286 : vector<8x32xf32>
    %288 = vector.extract_strided_slice %285 {offsets = [0, 32], sizes = [8, 32], strides = [1, 1]} : vector<8x128xf32> to vector<8x32xf32>
    %289 = arith.mulf %288, %253 : vector<8x32xf32>
    %290 = vector.extract_strided_slice %285 {offsets = [0, 0], sizes = [8, 32], strides = [1, 1]} : vector<8x128xf32> to vector<8x32xf32>
    %291 = arith.mulf %290, %287 : vector<8x32xf32>
    %292 = arith.addf %289, %291 : vector<8x32xf32>
    %293 = vector.extract_strided_slice %285 {offsets = [0, 96], sizes = [8, 32], strides = [1, 1]} : vector<8x128xf32> to vector<8x32xf32>
    %294 = math.tanh %292 : vector<8x32xf32>
    %295 = arith.mulf %293, %294 : vector<8x32xf32>
    %296 = vector.extract_strided_slice %277 {offsets = [0, 128], sizes = [8, 128], strides = [1, 1]} : vector<8x256xf32> to vector<8x128xf32>
    %297 = arith.negf %296 : vector<8x128xf32>
    %298 = math.exp %297 : vector<8x128xf32>
    %cst_64 = arith.constant 1.000000e+00 : f32
    %299 = vector.broadcast %cst_64 : f32 to vector<8x128xf32>
    %300 = arith.addf %299, %298 : vector<8x128xf32>
    %301 = arith.divf %299, %300 : vector<8x128xf32>
    %302 = vector.extract_strided_slice %296 {offsets = [0, 64], sizes = [8, 32], strides = [1, 1]} : vector<8x128xf32> to vector<8x32xf32>
    %303 = math.tanh %302 : vector<8x32xf32>
    %304 = vector.extract_strided_slice %301 {offsets = [0, 32], sizes = [8, 32], strides = [1, 1]} : vector<8x128xf32> to vector<8x32xf32>
    %305 = arith.mulf %304, %269 : vector<8x32xf32>
    %306 = vector.extract_strided_slice %301 {offsets = [0, 0], sizes = [8, 32], strides = [1, 1]} : vector<8x128xf32> to vector<8x32xf32>
    %307 = arith.mulf %306, %303 : vector<8x32xf32>
    %308 = arith.addf %305, %307 : vector<8x32xf32>
    %309 = vector.extract_strided_slice %301 {offsets = [0, 96], sizes = [8, 32], strides = [1, 1]} : vector<8x128xf32> to vector<8x32xf32>
    %310 = math.tanh %308 : vector<8x32xf32>
    %311 = arith.mulf %309, %310 : vector<8x32xf32>
    %c48_65 = arith.constant 48 : index
    %c0_66 = arith.constant 0 : index
    %312 = vector.load %arg14[%c48_65, %c0_66] : memref<64x32xf32, #tpu.memory_space<vmem>>, vector<8x32xf32>
    tpu.vector_store %arg14[%c48_65, %c0_66], %311 {strides = array<i32>} : memref<64x32xf32, #tpu.memory_space<vmem>>, vector<8x32xf32>,
    %313 = tpu.concatenate %295, %311 in 1 : vector<8x32xf32>, vector<8x32xf32> -> vector<8x64xf32>
    %314 = arith.truncf %313 : vector<8x64xf32> to vector<8x64xbf16>
    %cst_67 = arith.constant dense<0.000000e+00> : vector<8x256xf32>
    %315 = tpu.matmul %314, %6, %cst_67 {dimension_numbers = #tpu.dot_dimension_numbers<[1], [0], [0], [1], [0, 0, 1, 1], [], []>} : vector<8x64xbf16>, vector<64x256xbf16>, vector<8x256xf32> -> vector<8x256xf32>
    %316 = arith.addf %315, %9 : vector<8x256xf32>
    %317 = vector.extract_strided_slice %316 {offsets = [0, 128], sizes = [8, 128], strides = [1, 1]} : vector<8x256xf32> to vector<8x128xf32>
    %318 = arith.negf %317 : vector<8x128xf32>
    %319 = math.exp %318 : vector<8x128xf32>
    %cst_68 = arith.constant 1.000000e+00 : f32
    %320 = vector.broadcast %cst_68 : f32 to vector<8x128xf32>
    %321 = arith.addf %320, %319 : vector<8x128xf32>
    %322 = arith.divf %320, %321 : vector<8x128xf32>
    %323 = vector.extract_strided_slice %317 {offsets = [0, 64], sizes = [8, 32], strides = [1, 1]} : vector<8x128xf32> to vector<8x32xf32>
    %324 = math.tanh %323 : vector<8x32xf32>
    %325 = vector.extract_strided_slice %322 {offsets = [0, 32], sizes = [8, 32], strides = [1, 1]} : vector<8x128xf32> to vector<8x32xf32>
    %326 = arith.mulf %325, %308 : vector<8x32xf32>
    %327 = vector.extract_strided_slice %322 {offsets = [0, 0], sizes = [8, 32], strides = [1, 1]} : vector<8x128xf32> to vector<8x32xf32>
    %328 = arith.mulf %327, %324 : vector<8x32xf32>
    %329 = arith.addf %326, %328 : vector<8x32xf32>
    %330 = vector.extract_strided_slice %322 {offsets = [0, 96], sizes = [8, 32], strides = [1, 1]} : vector<8x128xf32> to vector<8x32xf32>
    %331 = math.tanh %329 : vector<8x32xf32>
    %332 = arith.mulf %330, %331 : vector<8x32xf32>
    %c56_69 = arith.constant 56 : index
    %c0_70 = arith.constant 0 : index
    %333 = vector.load %arg14[%c56_69, %c0_70] : memref<64x32xf32, #tpu.memory_space<vmem>>, vector<8x32xf32>
    tpu.vector_store %arg14[%c56_69, %c0_70], %332 {strides = array<i32>} : memref<64x32xf32, #tpu.memory_space<vmem>>, vector<8x32xf32>,
    %334 = tpu.concatenate %295, %332, %292, %329 in 1 : vector<8x32xf32>, vector<8x32xf32>, vector<8x32xf32>, vector<8x32xf32> -> vector<8x128xf32>
    %c0_71 = arith.constant 0 : index
    %c0_72 = arith.constant 0 : index
    %335 = vector.load %arg12[%c0_71, %c0_72] : memref<8x128xf32, #tpu.memory_space<vmem>>, vector<8x128xf32>
    tpu.vector_store %arg12[%c0_71, %c0_72], %334 {strides = array<i32>} : memref<8x128xf32, #tpu.memory_space<vmem>>, vector<8x128xf32>,
    %c0_73 = arith.constant 0 : index
    %c0_74 = arith.constant 0 : index
    %336 = vector.load %arg14[%c0_73, %c0_74] : memref<64x32xf32, #tpu.memory_space<vmem>>, vector<64x32xf32>
    %337 = arith.truncf %336 : vector<64x32xf32> to vector<64x32xbf16>
    %c0_75 = arith.constant 0 : index
    %c0_76 = arith.constant 0 : index
    %338 = vector.load %arg7[%c0_75, %c0_76] : memref<32x64xbf16, #tpu.memory_space<vmem>>, vector<32x64xbf16>
    %cst_77 = arith.constant dense<0.000000e+00> : vector<64x64xf32>
    %339 = tpu.matmul %337, %338, %cst_77 {dimension_numbers = #tpu.dot_dimension_numbers<[1], [0], [0], [1], [0, 0, 1, 1], [], []>} : vector<64x32xbf16>, vector<32x64xbf16>, vector<64x64xf32> -> vector<64x64xf32>
    %c0_78 = arith.constant 0 : index
    %c0_79 = arith.constant 0 : index
    %340 = vector.load %arg8[%c0_78, %c0_79] : memref<1x64xf32, #tpu.memory_space<vmem>>, vector<1x64xf32>
    %341 = vector.broadcast %340 : vector<1x64xf32> to vector<64x64xf32>
    %342 = arith.addf %339, %341 : vector<64x64xf32>
    %cst_80 = arith.constant 0.000000e+00 : f32
    %343 = vector.broadcast %cst_80 : f32 to vector<64x64xf32>
    %344 = arith.maximumf %342, %343 : vector<64x64xf32>
    %345 = arith.truncf %344 : vector<64x64xf32> to vector<64x64xbf16>
    %c0_81 = arith.constant 0 : index
    %c0_82 = arith.constant 0 : index
    %346 = vector.load %arg9[%c0_81, %c0_82] : memref<64x16xbf16, #tpu.memory_space<vmem>>, vector<64x16xbf16>
    %cst_83 = arith.constant dense<0.000000e+00> : vector<64x16xf32>
    %347 = tpu.matmul %345, %346, %cst_83 {dimension_numbers = #tpu.dot_dimension_numbers<[1], [0], [0], [1], [0, 0, 1, 1], [], []>} : vector<64x64xbf16>, vector<64x16xbf16>, vector<64x16xf32> -> vector<64x16xf32>
    %c0_84 = arith.constant 0 : index
    %c0_85 = arith.constant 0 : index
    %348 = vector.load %arg10[%c0_84, %c0_85] : memref<1x16xf32, #tpu.memory_space<vmem>>, vector<1x16xf32>
    %349 = vector.broadcast %348 : vector<1x16xf32> to vector<64x16xf32>
    %350 = arith.addf %347, %349 : vector<64x16xf32>
    %351 = vector.extract_strided_slice %350 {offsets = [0, 0], sizes = [8, 16], strides = [1, 1]} : vector<64x16xf32> to vector<8x16xf32>
    %352 = vector.extract_strided_slice %350 {offsets = [8, 0], sizes = [8, 16], strides = [1, 1]} : vector<64x16xf32> to vector<8x16xf32>
    %353 = vector.extract_strided_slice %350 {offsets = [16, 0], sizes = [8, 16], strides = [1, 1]} : vector<64x16xf32> to vector<8x16xf32>
    %354 = vector.extract_strided_slice %350 {offsets = [24, 0], sizes = [8, 16], strides = [1, 1]} : vector<64x16xf32> to vector<8x16xf32>
    %355 = vector.extract_strided_slice %350 {offsets = [32, 0], sizes = [8, 16], strides = [1, 1]} : vector<64x16xf32> to vector<8x16xf32>
    %356 = vector.extract_strided_slice %350 {offsets = [40, 0], sizes = [8, 16], strides = [1, 1]} : vector<64x16xf32> to vector<8x16xf32>
    %357 = vector.extract_strided_slice %350 {offsets = [48, 0], sizes = [8, 16], strides = [1, 1]} : vector<64x16xf32> to vector<8x16xf32>
    %358 = vector.extract_strided_slice %350 {offsets = [56, 0], sizes = [8, 16], strides = [1, 1]} : vector<64x16xf32> to vector<8x16xf32>
    %359 = tpu.concatenate %351, %352, %353, %354, %355, %356, %357, %358 in 1 : vector<8x16xf32>, vector<8x16xf32>, vector<8x16xf32>, vector<8x16xf32>, vector<8x16xf32>, vector<8x16xf32>, vector<8x16xf32>, vector<8x16xf32> -> vector<8x128xf32>
    %c0_86 = arith.constant 0 : index
    %c0_87 = arith.constant 0 : index
    %360 = vector.load %arg11[%c0_86, %c0_87] : memref<8x128xf32, #tpu.memory_space<vmem>>, vector<8x128xf32>
    tpu.vector_store %arg11[%c0_86, %c0_87], %359 {strides = array<i32>} : memref<8x128xf32, #tpu.memory_space<vmem>>, vector<8x128xf32>,
    return
  }
  func.func @transform_0(%arg0: i32) -> (i32, i32, i32) {
    %c0_i32 = arith.constant 0 : i32
    %c0_i32_0 = arith.constant 0 : i32
    %c0_i32_1 = arith.constant 0 : i32
    return %c0_i32, %arg0, %c0_i32_0 : i32, i32, i32
  }
  func.func @transform_1(%arg0: i32) -> (i32, i32, i32) {
    %c0_i32 = arith.constant 0 : i32
    %c0_i32_0 = arith.constant 0 : i32
    %c0_i32_1 = arith.constant 0 : i32
    return %c0_i32, %arg0, %c0_i32_0 : i32, i32, i32
  }
  func.func @transform_2(%arg0: i32) -> (i32, i32, i32) {
    %c0_i32 = arith.constant 0 : i32
    %c0_i32_0 = arith.constant 0 : i32
    %c0_i32_1 = arith.constant 0 : i32
    return %c0_i32, %arg0, %c0_i32_0 : i32, i32, i32
  }
  func.func @transform_3(%arg0: i32) -> (i32, i32) {
    %c0_i32 = arith.constant 0 : i32
    %c0_i32_0 = arith.constant 0 : i32
    %c0_i32_1 = arith.constant 0 : i32
    return %c0_i32, %c0_i32_0 : i32, i32
  }
  func.func @transform_4(%arg0: i32) -> (i32, i32) {
    %c0_i32 = arith.constant 0 : i32
    %c0_i32_0 = arith.constant 0 : i32
    %c0_i32_1 = arith.constant 0 : i32
    return %c0_i32, %c0_i32_0 : i32, i32
  }
  func.func @transform_5(%arg0: i32) -> (i32, i32) {
    %c0_i32 = arith.constant 0 : i32
    %c0_i32_0 = arith.constant 0 : i32
    %c0_i32_1 = arith.constant 0 : i32
    return %c0_i32, %c0_i32_0 : i32, i32
  }
  func.func @transform_6(%arg0: i32) -> (i32, i32) {
    %c0_i32 = arith.constant 0 : i32
    %c0_i32_0 = arith.constant 0 : i32
    %c0_i32_1 = arith.constant 0 : i32
    return %c0_i32, %c0_i32_0 : i32, i32
  }
  func.func @transform_7(%arg0: i32) -> (i32, i32) {
    %c0_i32 = arith.constant 0 : i32
    %c0_i32_0 = arith.constant 0 : i32
    %c0_i32_1 = arith.constant 0 : i32
    return %c0_i32, %c0_i32_0 : i32, i32
  }
  func.func @transform_8(%arg0: i32) -> (i32, i32) {
    %c0_i32 = arith.constant 0 : i32
    %c0_i32_0 = arith.constant 0 : i32
    %c0_i32_1 = arith.constant 0 : i32
    return %c0_i32, %c0_i32_0 : i32, i32
  }
  func.func @transform_9(%arg0: i32) -> (i32, i32) {
    %c0_i32 = arith.constant 0 : i32
    %c0_i32_0 = arith.constant 0 : i32
    %c0_i32_1 = arith.constant 0 : i32
    return %c0_i32, %c0_i32_0 : i32, i32
  }
  func.func @transform_10(%arg0: i32) -> (i32, i32) {
    %c0_i32 = arith.constant 0 : i32
    %c0_i32_0 = arith.constant 0 : i32
    return %arg0, %c0_i32 : i32, i32
  }
  func.func @transform_11(%arg0: i32) -> (i32, i32) {
    %c0_i32 = arith.constant 0 : i32
    %c0_i32_0 = arith.constant 0 : i32
    return %arg0, %c0_i32 : i32, i32
  }
}

</mosaic_0001>

<llo_original>
// kernel: lstm_model_forward.1
$region0: #{lstm_model_forward.1}
  #allocation0 [shape = 'u32[]', space=smem, size = 0x4, offset = 0x4, fixed_abs, tag = 'smem constant byte address 0x4 - core index']
  #allocation1 [shape = 'u32[144,128]{1,0:T(1,128)}', space=vmem, size = 0x12000, scoped, tag = 'internal scratch']
  #allocation2 [shape = 'f32[64,128]{1,0:T(8,128)}', space=vmem, size = 0x8000, scoped, tag = 'scratch operand']
  #allocation3 [shape = 'f32[64,32]{1,0:T(8,128)}', space=vmem, size = 0x8000, scoped, tag = 'scratch operand']
  %s0 = inlined_call_operand.vmem [shape: f32[8,8,16], index: 0, kind: input, shape index: {}]
  %s1 = inlined_call_operand.vmem [shape: f32[2,8,32], index: 1, kind: input, shape index: {}]
  %s2 = inlined_call_operand.vmem [shape: f32[2,8,32], index: 2, kind: input, shape index: {}]
  %s3 = inlined_call_operand.vmem [shape: bf16[16,128], index: 3, kind: input, shape index: {}]
  %s4 = inlined_call_operand.vmem [shape: bf16[64,256], index: 4, kind: input, shape index: {}]
  %s5 = inlined_call_operand.vmem [shape: f32[1,256], index: 5, kind: input, shape index: {}]
  %s6 = inlined_call_operand.vmem [shape: bf16[32,64], index: 6, kind: input, shape index: {}]
  %s7 = inlined_call_operand.vmem [shape: f32[1,64], index: 7, kind: input, shape index: {}]
  %s8 = inlined_call_operand.vmem [shape: bf16[64,16], index: 8, kind: input, shape index: {}]
  %s9 = inlined_call_operand.vmem [shape: f32[1,16], index: 9, kind: input, shape index: {}]
  %s10 = inlined_call_operand.vmem [shape: f32[8,128], index: 10, kind: output, shape index: {0}]
  %s11 = inlined_call_operand.vmem [shape: f32[8,128], index: 11, kind: output, shape index: {1}]
  %12 = xla_tuple %s10, %s11
  %s13 = sld [smem:[#allocation0]]
  $region58: #{lstm_model_forward.1} parent=0
    _
  %s15 = ssub.s32 1, %s13
  %s16 = scalar_select 0, %s15, %s13
  // Predicated region
  $region2: #{lstm_model_forward.1} parent=0 // pred_check
    _
  $region3: #{lstm_model_forward.1} parent=0 // pred_check_branch
    %18 = sbr.rel (0) target = $region5
  $region4: #{lstm_model_forward.1} parent=0 // pred_region
    _
  $region5: #{lstm_model_forward.1} parent=0 // pred_fallthru
    _
  // Predicated region
  $region6: #{lstm_model_forward.1} parent=0 // pred_check
    _
  $region7: #{lstm_model_forward.1} parent=0 // pred_check_branch
    %20 = sbr.rel (0) target = $region9
  $region8: #{lstm_model_forward.1} parent=0 // pred_region
    _
  $region9: #{lstm_model_forward.1} parent=0 // pred_fallthru
    _
  // Predicated region
  $region10: #{lstm_model_forward.1} parent=0 // pred_check
    _
  $region11: #{lstm_model_forward.1} parent=0 // pred_check_branch
    %22 = sbr.rel (0) target = $region13
  $region12: #{lstm_model_forward.1} parent=0 // pred_region
    _
  $region13: #{lstm_model_forward.1} parent=0 // pred_fallthru
    _
  // Predicated region
  $region14: #{lstm_model_forward.1} parent=0 // pred_check
    _
  $region15: #{lstm_model_forward.1} parent=0 // pred_check_branch
    %24 = sbr.rel (0) target = $region17
  $region16: #{lstm_model_forward.1} parent=0 // pred_region
    _
  $region17: #{lstm_model_forward.1} parent=0 // pred_fallthru
    _
  // Predicated region
  $region18: #{lstm_model_forward.1} parent=0 // pred_check
    _
  $region19: #{lstm_model_forward.1} parent=0 // pred_check_branch
    %26 = sbr.rel (0) target = $region21
  $region20: #{lstm_model_forward.1} parent=0 // pred_region
    _
  $region21: #{lstm_model_forward.1} parent=0 // pred_fallthru
    _
  // Predicated region
  $region22: #{lstm_model_forward.1} parent=0 // pred_check
    _
  $region23: #{lstm_model_forward.1} parent=0 // pred_check_branch
    %28 = sbr.rel (0) target = $region25
  $region24: #{lstm_model_forward.1} parent=0 // pred_region
    _
  $region25: #{lstm_model_forward.1} parent=0 // pred_fallthru
    _
  // Predicated region
  $region26: #{lstm_model_forward.1} parent=0 // pred_check
    _
  $region27: #{lstm_model_forward.1} parent=0 // pred_check_branch
    %30 = sbr.rel (0) target = $region29
  $region28: #{lstm_model_forward.1} parent=0 // pred_region
    _
  $region29: #{lstm_model_forward.1} parent=0 // pred_fallthru
    _
  // Predicated region
  $region30: #{lstm_model_forward.1} parent=0 // pred_check
    _
  $region31: #{lstm_model_forward.1} parent=0 // pred_check_branch
    %32 = sbr.rel (0) target = $region33
  $region32: #{lstm_model_forward.1} parent=0 // pred_region
    _
  $region33: #{lstm_model_forward.1} parent=0 // pred_fallthru
    _
  // Predicated region
  $region34: #{lstm_model_forward.1} parent=0 // pred_check
    _
  $region35: #{lstm_model_forward.1} parent=0 // pred_check_branch
    %34 = sbr.rel (0) target = $region37
  $region36: #{lstm_model_forward.1} parent=0 // pred_region
    _
  $region37: #{lstm_model_forward.1} parent=0 // pred_fallthru
    _
  // Predicated region
  $region38: #{lstm_model_forward.1} parent=0 // pred_check
    _
  $region39: #{lstm_model_forward.1} parent=0 // pred_check_branch
    %36 = sbr.rel (0) target = $region41
  $region40: #{lstm_model_forward.1} parent=0 // pred_region
    _
  $region41: #{lstm_model_forward.1} parent=0 // pred_fallthru
    _
  %v38 = vld [vmem:[%s0] sm:$0xff]
  %v39 = vld [vmem:[%s0 + $0x8] sm:$0xff]
  %v40 = vld [vmem:[%s0 + $0x10] sm:$0xff]
  %v41 = vld [vmem:[%s0 + $0x18] sm:$0xff]
  %v42 = vld [vmem:[%s0 + $0x20] sm:$0xff]
  %v43 = vld [vmem:[%s0 + $0x28] sm:$0xff]
  %v44 = vld [vmem:[%s0 + $0x30] sm:$0xff]
  %v45 = vld [vmem:[%s0 + $0x38] sm:$0xff]
  %v46 = vpack.c.bf16 %v39, %v38
  %v47 = vpack.c.bf16 %v41, %v40
  %v48 = vpack.c.bf16 %v43, %v42
  %v49 = vpack.c.bf16 %v45, %v44
  %v50 = vld [vmem:[%s3] sm:$0xf]
  %v51 = vld [vmem:[%s3 + $0x4] sm:$0xf]
  %v54 = vunpack.c.l.b16 %v50
  %v55 = vunpack.c.l.b16 %v51
  %v56 = vpack.c.b16 %v55, %v54
  %vm58 = vcmask 130048
  %v60 = vsel %vm58, %v46, 0
  %v63 = vsel %vm58, %v47, 0
  %v66 = vsel %vm58, %v48, 0
  %v69 = vsel %vm58, %v49, 0
  %71 = vmatprep.subr.bf16.mxu0 0
  %72 = vmatpush1.bf16.msra.mxu0 0
  %73 = vmatprep.subr.bf16.mxu0 0
  %74 = vmatpush1.bf16.msra.mxu0 0
  %75 = vmatprep.subr.bf16.mxu0 0
  %76 = vmatpush1.bf16.msra.mxu0 0
  %77 = vmatprep.subr.bf16.mxu0 0
  %78 = vmatpush1.bf16.msra.mxu0 0
  %79 = vmatprep.subr.bf16.mxu0 0
  %80 = vmatpush1.bf16.msra.mxu0 0
  %81 = vmatprep.subr.bf16.mxu0 0
  %82 = vmatpush1.bf16.msra.mxu0 0
  %83 = vmatprep.subr.bf16.mxu0 0
  %84 = vmatpush1.bf16.msra.mxu0 0
  %85 = vmatprep.subr.bf16.mxu0 0
  %86 = vmatpush1.bf16.msra.mxu0 %v56
  %87 = vmatprep.subr.bf16.mxu0 0
  %88 = vmatpush2.bf16.msra.mxu0 0
  %89 = vmatprep.subr.bf16.mxu0 0
  %90 = vmatpush2.bf16.msra.mxu0 0
  %91 = vmatprep.subr.bf16.mxu0 0
  %92 = vmatpush2.bf16.msra.mxu0 0
  %93 = vmatprep.subr.bf16.mxu0 0
  %94 = vmatpush2.bf16.msra.mxu0 0
  %95 = vmatprep.subr.bf16.mxu0 0
  %96 = vmatpush2.bf16.msra.mxu0 0
  %97 = vmatprep.subr.bf16.mxu0 0
  %98 = vmatpush2.bf16.msra.mxu0 0
  %99 = vmatprep.subr.bf16.mxu0 0
  %100 = vmatpush2.bf16.msra.mxu0 0
  %101 = vmatprep.subr.bf16.mxu0 0
  %102 = vmatpush2.bf16.msra.mxu0 0
  %103 = vmatprep.mubr.bf16.mxu0 0
  %104 = vmatmul.mubr.bf16.gmra.mxu0 %v60
  %v105 = vpop.f32.mrf.mxu0
  %v106 = vadd.f32 0.0, %v105
  %v107 = vpop.f32.mrf.mxu0
  %v108 = vpop.f32.mrf.mxu0
  %v109 = vadd.f32 0.0, %v108
  %v110 = vpop.f32.mrf.mxu0
  %111 = vmatprep.mubr.bf16.mxu0 0
  %112 = vmatmul.mubr.bf16.gmra.mxu0 %v63
  %v113 = vpop.f32.mrf.mxu0
  %v114 = vadd.f32 0.0, %v113
  %v115 = vpop.f32.mrf.mxu0
  %v116 = vpop.f32.mrf.mxu0
  %v117 = vadd.f32 0.0, %v116
  %v118 = vpop.f32.mrf.mxu0
  %119 = vmatprep.mubr.bf16.mxu0 0
  %120 = vmatmul.mubr.bf16.gmra.mxu0 %v66
  %v121 = vpop.f32.mrf.mxu0
  %v122 = vadd.f32 0.0, %v121
  %v123 = vpop.f32.mrf.mxu0
  %v124 = vpop.f32.mrf.mxu0
  %v125 = vadd.f32 0.0, %v124
  %v126 = vpop.f32.mrf.mxu0
  %127 = vmatprep.mubr.bf16.mxu0 0
  %128 = vmatmul.mubr.bf16.gmra.mxu0 %v69
  %v129 = vpop.f32.mrf.mxu0
  %v130 = vadd.f32 0.0, %v129
  %v131 = vpop.f32.mrf.mxu0
  %v132 = vpop.f32.mrf.mxu0
  %v133 = vadd.f32 0.0, %v132
  %v134 = vpop.f32.mrf.mxu0
  %135 = vdwg.mxu0
  %136 = vst [vmem:[#allocation2] sm:$0xff] %v106
  %137 = vst [vmem:[#allocation2 + $0x8] sm:$0xff] %v109
  %138 = vst [vmem:[#allocation2 + $0x10] sm:$0xff] %v114
  %139 = vst [vmem:[#allocation2 + $0x18] sm:$0xff] %v117
  %140 = vst [vmem:[#allocation2 + $0x20] sm:$0xff] %v122
  %141 = vst [vmem:[#allocation2 + $0x28] sm:$0xff] %v125
  %142 = vst [vmem:[#allocation2 + $0x30] sm:$0xff] %v130
  %143 = vst [vmem:[#allocation2 + $0x38] sm:$0xff] %v133
  %v144 = vld [vmem:[%s4] sm:$0xff]
  %v145 = vld [vmem:[%s4 + $0x8] sm:$0xff]
  %v146 = vld [vmem:[%s4 + $0x10] sm:$0xff]
  %v147 = vld [vmem:[%s4 + $0x18] sm:$0xff]
  %v148 = vld [vmem:[%s4 + $0x20] sm:$0xff]
  %v149 = vld [vmem:[%s4 + $0x28] sm:$0xff]
  %v150 = vld [vmem:[%s4 + $0x30] sm:$0xff]
  %v151 = vld [vmem:[%s4 + $0x38] sm:$0xff]
  %v152 = vld [vmem:[%s5] sm:$0x3]
  %v154 = vlaneseq
  %v155 = vshrl.u32 %v154, 7
  %v156 = vsub.s32 0, %v155
  %v157 = vrot.slane %v152, %v156
  %v158 = vlaneseq
  %v159 = vshrl.u32 %v158, 7
  %v160 = vsub.s32 1, %v159
  %v161 = vrot.slane %v152, %v160
  %v164 = vld [vmem:[%s1] sm:$0xff]
  %s165 = scalar_lea.vmem %s1, 8
  %v166 = vld [vmem:[%s165] sm:$0xff]
  %v167 = vld [vmem:[%s2] sm:$0xff]
  %s168 = scalar_lea.vmem %s2, 8
  %v169 = vld [vmem:[%s168] sm:$0xff]
  %171 = vrot.lane.b32.xlu0 %v166, 32
  %v172 = vpop.permute.xlu0 %171
  %vm174 = vcmask 261120
  %v175 = vsel %vm174, %v164, %v172
  %v176 = vpack.c.bf16 %v175, %v175
  %v185 = vunpack.c.l.b16 %v144
  %v186 = vunpack.c.h.b16 %v144
  %v187 = vunpack.c.l.b16 %v145
  %v188 = vunpack.c.h.b16 %v145
  %v189 = vunpack.c.l.b16 %v146
  %v190 = vunpack.c.h.b16 %v146
  %v191 = vunpack.c.l.b16 %v147
  %v192 = vunpack.c.h.b16 %v147
  %v193 = vunpack.c.l.b16 %v148
  %v194 = vunpack.c.h.b16 %v148
  %v195 = vunpack.c.l.b16 %v149
  %v196 = vunpack.c.h.b16 %v149
  %v197 = vunpack.c.l.b16 %v150
  %v198 = vunpack.c.h.b16 %v150
  %v199 = vunpack.c.l.b16 %v151
  %v200 = vunpack.c.h.b16 %v151
  %v201 = vpack.c.b16 %v187, %v185
  %v202 = vpack.c.b16 %v188, %v186
  %v203 = vpack.c.b16 %v191, %v189
  %v204 = vpack.c.b16 %v192, %v190
  %v205 = vpack.c.b16 %v195, %v193
  %v206 = vpack.c.b16 %v196, %v194
  %v207 = vpack.c.b16 %v199, %v197
  %v208 = vpack.c.b16 %v200, %v198
  %vm217 = vcmask 523264
  %v219 = vsel %vm217, %v176, 0
  %221 = vmatprep.subr.bf16.mxu0 0
  %222 = vmatpush1.bf16.msra.mxu0 0
  %223 = vmatprep.subr.bf16.mxu0 0
  %224 = vmatpush1.bf16.msra.mxu0 0
  %225 = vmatprep.subr.bf16.mxu0 0
  %226 = vmatpush1.bf16.msra.mxu0 0
  %227 = vmatprep.subr.bf16.mxu0 0
  %228 = vmatpush1.bf16.msra.mxu0 0
  %229 = vmatprep.subr.bf16.mxu0 %v208
  %230 = vmatpush1.bf16.msra.mxu0 %v207
  %231 = vmatprep.subr.bf16.mxu0 %v206
  %232 = vmatpush1.bf16.msra.mxu0 %v205
  %233 = vmatprep.subr.bf16.mxu0 %v204
  %234 = vmatpush1.bf16.msra.mxu0 %v203
  %235 = vmatprep.subr.bf16.mxu0 %v202
  %236 = vmatpush1.bf16.msra.mxu0 %v201
  %237 = vmatprep.subr.bf16.mxu0 0
  %238 = vmatpush2.bf16.msra.mxu0 0
  %239 = vmatprep.subr.bf16.mxu0 0
  %240 = vmatpush2.bf16.msra.mxu0 0
  %241 = vmatprep.subr.bf16.mxu0 0
  %242 = vmatpush2.bf16.msra.mxu0 0
  %243 = vmatprep.subr.bf16.mxu0 0
  %244 = vmatpush2.bf16.msra.mxu0 0
  %245 = vmatprep.subr.bf16.mxu0 0
  %246 = vmatpush2.bf16.msra.mxu0 0
  %247 = vmatprep.subr.bf16.mxu0 0
  %248 = vmatpush2.bf16.msra.mxu0 0
  %249 = vmatprep.subr.bf16.mxu0 0
  %250 = vmatpush2.bf16.msra.mxu0 0
  %251 = vmatprep.subr.bf16.mxu0 0
  %252 = vmatpush2.bf16.msra.mxu0 0
  %253 = vmatprep.mubr.bf16.mxu0 0
  %254 = vmatmul.mubr.bf16.gmra.mxu0 %v219
  %v255 = vpop.f32.mrf.mxu0
  %v256 = vadd.f32 %v157, %v255
  %v257 = vpop.f32.mrf.mxu0
  %v258 = vpop.f32.mrf.mxu0
  %v259 = vpop.f32.mrf.mxu0
  %260 = vdwg.mxu0
  %v261 = vld [vmem:[#allocation2] sm:$0xff]
  %v262 = vadd.f32 %v256, %v261
  %v263 = vxor.u32 %v262, 2147483648
  %v264 = vmul.f32 %v263, 1.442695
  %v265 = vpow.pop %v264
  %v266 = vadd.f32 %v265, 1.0
  %v267 = vrcp.pop %v266
  %v268 = vmul.f32 1.0, %v267
  %v269 = vtanh.pop %v262
  %271 = vrot.lane.b32.xlu0 %v167, 32
  %v272 = vpop.permute.xlu0 %271
  %v274 = vmul.f32 %v268, %v272
  %276 = vrot.lane.b32.xlu0 %v269, 64
  %v277 = vpop.permute.xlu0 %276
  %v279 = vmul.f32 %v268, %v277
  %281 = vrot.lane.b32.xlu0 %v279, 32
  %v282 = vpop.permute.xlu0 %281
  %v284 = vadd.f32 %v274, %v282
  %v285 = vtanh.pop %v284
  %287 = vrot.lane.b32.xlu0 %v285, 64
  %v288 = vpop.permute.xlu0 %287
  %v290 = vmul.f32 %v268, %v288
  %292 = vrot.lane.b32.xlu0 %v290, 32
  %v293 = vpop.permute.xlu0 %292
  %v295 = vsel %vm174, %v293, %v172
  %v296 = vpack.c.bf16 %v295, %v295
  %v298 = vsel %vm217, %v296, 0
  %300 = vmatprep.subr.bf16.mxu0 0
  %301 = vmatpush1.bf16.msra.mxu0 0
  %302 = vmatprep.subr.bf16.mxu0 0
  %303 = vmatpush1.bf16.msra.mxu0 0
  %304 = vmatprep.subr.bf16.mxu0 0
  %305 = vmatpush1.bf16.msra.mxu0 0
  %306 = vmatprep.subr.bf16.mxu0 0
  %307 = vmatpush1.bf16.msra.mxu0 0
  %308 = vmatprep.subr.bf16.mxu0 %v208
  %309 = vmatpush1.bf16.msra.mxu0 %v207
  %310 = vmatprep.subr.bf16.mxu0 %v206
  %311 = vmatpush1.bf16.msra.mxu0 %v205
  %312 = vmatprep.subr.bf16.mxu0 %v204
  %313 = vmatpush1.bf16.msra.mxu0 %v203
  %314 = vmatprep.subr.bf16.mxu0 %v202
  %315 = vmatpush1.bf16.msra.mxu0 %v201
  %316 = vmatprep.subr.bf16.mxu0 0
  %317 = vmatpush2.bf16.msra.mxu0 0
  %318 = vmatprep.subr.bf16.mxu0 0
  %319 = vmatpush2.bf16.msra.mxu0 0
  %320 = vmatprep.subr.bf16.mxu0 0
  %321 = vmatpush2.bf16.msra.mxu0 0
  %322 = vmatprep.subr.bf16.mxu0 0
  %323 = vmatpush2.bf16.msra.mxu0 0
  %324 = vmatprep.subr.bf16.mxu0 0
  %325 = vmatpush2.bf16.msra.mxu0 0
  %326 = vmatprep.subr.bf16.mxu0 0
  %327 = vmatpush2.bf16.msra.mxu0 0
  %328 = vmatprep.subr.bf16.mxu0 0
  %329 = vmatpush2.bf16.msra.mxu0 0
  %330 = vmatprep.subr.bf16.mxu0 0
  %331 = vmatpush2.bf16.msra.mxu0 0
  %332 = vmatprep.mubr.bf16.mxu0 0
  %333 = vmatmul.mubr.bf16.gmra.mxu0 %v298
  %v334 = vpop.f32.mrf.mxu0
  %v335 = vadd.f32 %v157, %v334
  %v336 = vpop.f32.mrf.mxu0
  %v337 = vadd.f32 %v161, %v336
  %v338 = vpop.f32.mrf.mxu0
  %v339 = vpop.f32.mrf.mxu0
  %340 = vdwg.mxu0
  %v341 = vld [vmem:[#allocation2 + $0x8] sm:$0xff]
  %v342 = vadd.f32 %v335, %v341
  %v343 = vxor.u32 %v342, 2147483648
  %v344 = vmul.f32 %v343, 1.442695
  %v345 = vpow.pop %v344
  %v346 = vadd.f32 %v345, 1.0
  %v347 = vrcp.pop %v346
  %v348 = vmul.f32 1.0, %v347
  %v349 = vtanh.pop %v342
  %v350 = vmul.f32 %v348, %v284
  %352 = vrot.lane.b32.xlu0 %v349, 64
  %v353 = vpop.permute.xlu0 %352
  %v355 = vmul.f32 %v348, %v353
  %357 = vrot.lane.b32.xlu0 %v355, 32
  %v358 = vpop.permute.xlu0 %357
  %v360 = vadd.f32 %v350, %v358
  %v361 = vtanh.pop %v360
  %363 = vrot.lane.b32.xlu0 %v361, 64
  %v364 = vpop.permute.xlu0 %363
  %v366 = vmul.f32 %v348, %v364
  %v367 = vxor.u32 %v337, 2147483648
  %v368 = vmul.f32 %v367, 1.442695
  %v369 = vpow.pop %v368
  %v370 = vadd.f32 %v369, 1.0
  %v371 = vrcp.pop %v370
  %v372 = vmul.f32 1.0, %v371
  %v373 = vtanh.pop %v337
  %375 = vrot.lane.b32.xlu0 %v169, 32
  %v376 = vpop.permute.xlu0 %375
  %v378 = vmul.f32 %v372, %v376
  %380 = vrot.lane.b32.xlu0 %v373, 64
  %v381 = vpop.permute.xlu0 %380
  %v383 = vmul.f32 %v372, %v381
  %385 = vrot.lane.b32.xlu0 %v383, 32
  %v386 = vpop.permute.xlu0 %385
  %v388 = vadd.f32 %v378, %v386
  %v389 = vtanh.pop %v388
  %391 = vrot.lane.b32.xlu0 %v389, 64
  %v392 = vpop.permute.xlu0 %391
  %v394 = vmul.f32 %v372, %v392
  %396 = vrot.lane.b32.xlu0 %v394, 32
  %v397 = vpop.permute.xlu0 %396
  %399 = vst.msk [vmem:[#allocation3] sm:$0xff] %vm174, %v397
  %401 = vrot.lane.b32.xlu0 %v366, 32
  %v402 = vpop.permute.xlu0 %401
  %404 = vrot.lane.b32.xlu0 %v394, 64
  %v405 = vpop.permute.xlu0 %404
  %v407 = vsel %vm174, %v402, %v405
  %v408 = vpack.c.bf16 %v407, %v407
  %v410 = vsel %vm217, %v408, 0
  %412 = vmatprep.subr.bf16.mxu0 0
  %413 = vmatpush1.bf16.msra.mxu0 0
  %414 = vmatprep.subr.bf16.mxu0 0
  %415 = vmatpush1.bf16.msra.mxu0 0
  %416 = vmatprep.subr.bf16.mxu0 0
  %417 = vmatpush1.bf16.msra.mxu0 0
  %418 = vmatprep.subr.bf16.mxu0 0
  %419 = vmatpush1.bf16.msra.mxu0 0
  %420 = vmatprep.subr.bf16.mxu0 %v208
  %421 = vmatpush1.bf16.msra.mxu0 %v207
  %422 = vmatprep.subr.bf16.mxu0 %v206
  %423 = vmatpush1.bf16.msra.mxu0 %v205
  %424 = vmatprep.subr.bf16.mxu0 %v204
  %425 = vmatpush1.bf16.msra.mxu0 %v203
  %426 = vmatprep.subr.bf16.mxu0 %v202
  %427 = vmatpush1.bf16.msra.mxu0 %v201
  %428 = vmatprep.subr.bf16.mxu0 0
  %429 = vmatpush2.bf16.msra.mxu0 0
  %430 = vmatprep.subr.bf16.mxu0 0
  %431 = vmatpush2.bf16.msra.mxu0 0
  %432 = vmatprep.subr.bf16.mxu0 0
  %433 = vmatpush2.bf16.msra.mxu0 0
  %434 = vmatprep.subr.bf16.mxu0 0
  %435 = vmatpush2.bf16.msra.mxu0 0
  %436 = vmatprep.subr.bf16.mxu0 0
  %437 = vmatpush2.bf16.msra.mxu0 0
  %438 = vmatprep.subr.bf16.mxu0 0
  %439 = vmatpush2.bf16.msra.mxu0 0
  %440 = vmatprep.subr.bf16.mxu0 0
  %441 = vmatpush2.bf16.msra.mxu0 0
  %442 = vmatprep.subr.bf16.mxu0 0
  %443 = vmatpush2.bf16.msra.mxu0 0
  %444 = vmatprep.mubr.bf16.mxu0 0
  %445 = vmatmul.mubr.bf16.gmra.mxu0 %v410
  %v446 = vpop.f32.mrf.mxu0
  %v447 = vadd.f32 %v157, %v446
  %v448 = vpop.f32.mrf.mxu0
  %v449 = vadd.f32 %v161, %v448
  %v450 = vpop.f32.mrf.mxu0
  %v451 = vpop.f32.mrf.mxu0
  %452 = vdwg.mxu0
  %v453 = vld [vmem:[#allocation2 + $0x10] sm:$0xff]
  %v454 = vadd.f32 %v447, %v453
  %v455 = vxor.u32 %v454, 2147483648
  %v456 = vmul.f32 %v455, 1.442695
  %v457 = vpow.pop %v456
  %v458 = vadd.f32 %v457, 1.0
  %v459 = vrcp.pop %v458
  %v460 = vmul.f32 1.0, %v459
  %v461 = vtanh.pop %v454
  %v462 = vmul.f32 %v460, %v360
  %464 = vrot.lane.b32.xlu0 %v461, 64
  %v465 = vpop.permute.xlu0 %464
  %v467 = vmul.f32 %v460, %v465
  %469 = vrot.lane.b32.xlu0 %v467, 32
  %v470 = vpop.permute.xlu0 %469
  %v472 = vadd.f32 %v462, %v470
  %v473 = vtanh.pop %v472
  %475 = vrot.lane.b32.xlu0 %v473, 64
  %v476 = vpop.permute.xlu0 %475
  %v478 = vmul.f32 %v460, %v476
  %v479 = vxor.u32 %v449, 2147483648
  %v480 = vmul.f32 %v479, 1.442695
  %v481 = vpow.pop %v480
  %v482 = vadd.f32 %v481, 1.0
  %v483 = vrcp.pop %v482
  %v484 = vmul.f32 1.0, %v483
  %v485 = vtanh.pop %v449
  %v486 = vmul.f32 %v484, %v388
  %488 = vrot.lane.b32.xlu0 %v485, 64
  %v489 = vpop.permute.xlu0 %488
  %v491 = vmul.f32 %v484, %v489
  %493 = vrot.lane.b32.xlu0 %v491, 32
  %v494 = vpop.permute.xlu0 %493
  %v496 = vadd.f32 %v486, %v494
  %v497 = vtanh.pop %v496
  %499 = vrot.lane.b32.xlu0 %v497, 64
  %v500 = vpop.permute.xlu0 %499
  %v502 = vmul.f32 %v484, %v500
  %504 = vrot.lane.b32.xlu0 %v502, 32
  %v505 = vpop.permute.xlu0 %504
  %507 = vst.msk [vmem:[#allocation3 + $0x8] sm:$0xff] %vm174, %v505
  %509 = vrot.lane.b32.xlu0 %v478, 32
  %v510 = vpop.permute.xlu0 %509
  %512 = vrot.lane.b32.xlu0 %v502, 64
  %v513 = vpop.permute.xlu0 %512
  %v515 = vsel %vm174, %v510, %v513
  %v516 = vpack.c.bf16 %v515, %v515
  %v518 = vsel %vm217, %v516, 0
  %520 = vmatprep.subr.bf16.mxu0 0
  %521 = vmatpush1.bf16.msra.mxu0 0
  %522 = vmatprep.subr.bf16.mxu0 0
  %523 = vmatpush1.bf16.msra.mxu0 0
  %524 = vmatprep.subr.bf16.mxu0 0
  %525 = vmatpush1.bf16.msra.mxu0 0
  %526 = vmatprep.subr.bf16.mxu0 0
  %527 = vmatpush1.bf16.msra.mxu0 0
  %528 = vmatprep.subr.bf16.mxu0 %v208
  %529 = vmatpush1.bf16.msra.mxu0 %v207
  %530 = vmatprep.subr.bf16.mxu0 %v206
  %531 = vmatpush1.bf16.msra.mxu0 %v205
  %532 = vmatprep.subr.bf16.mxu0 %v204
  %533 = vmatpush1.bf16.msra.mxu0 %v203
  %534 = vmatprep.subr.bf16.mxu0 %v202
  %535 = vmatpush1.bf16.msra.mxu0 %v201
  %536 = vmatprep.subr.bf16.mxu0 0
  %537 = vmatpush2.bf16.msra.mxu0 0
  %538 = vmatprep.subr.bf16.mxu0 0
  %539 = vmatpush2.bf16.msra.mxu0 0
  %540 = vmatprep.subr.bf16.mxu0 0
  %541 = vmatpush2.bf16.msra.mxu0 0
  %542 = vmatprep.subr.bf16.mxu0 0
  %543 = vmatpush2.bf16.msra.mxu0 0
  %544 = vmatprep.subr.bf16.mxu0 0
  %545 = vmatpush2.bf16.msra.mxu0 0
  %546 = vmatprep.subr.bf16.mxu0 0
  %547 = vmatpush2.bf16.msra.mxu0 0
  %548 = vmatprep.subr.bf16.mxu0 0
  %549 = vmatpush2.bf16.msra.mxu0 0
  %550 = vmatprep.subr.bf16.mxu0 0
  %551 = vmatpush2.bf16.msra.mxu0 0
  %552 = vmatprep.mubr.bf16.mxu0 0
  %553 = vmatmul.mubr.bf16.gmra.mxu0 %v518
  %v554 = vpop.f32.mrf.mxu0
  %v555 = vadd.f32 %v157, %v554
  %v556 = vpop.f32.mrf.mxu0
  %v557 = vadd.f32 %v161, %v556
  %v558 = vpop.f32.mrf.mxu0
  %v559 = vpop.f32.mrf.mxu0
  %560 = vdwg.mxu0
  %v561 = vld [vmem:[#allocation2 + $0x18] sm:$0xff]
  %v562 = vadd.f32 %v555, %v561
  %v563 = vxor.u32 %v562, 2147483648
  %v564 = vmul.f32 %v563, 1.442695
  %v565 = vpow.pop %v564
  %v566 = vadd.f32 %v565, 1.0
  %v567 = vrcp.pop %v566
  %v568 = vmul.f32 1.0, %v567
  %v569 = vtanh.pop %v562
  %v570 = vmul.f32 %v568, %v472
  %572 = vrot.lane.b32.xlu0 %v569, 64
  %v573 = vpop.permute.xlu0 %572
  %v575 = vmul.f32 %v568, %v573
  %577 = vrot.lane.b32.xlu0 %v575, 32
  %v578 = vpop.permute.xlu0 %577
  %v580 = vadd.f32 %v570, %v578
  %v581 = vtanh.pop %v580
  %583 = vrot.lane.b32.xlu0 %v581, 64
  %v584 = vpop.permute.xlu0 %583
  %v586 = vmul.f32 %v568, %v584
  %v587 = vxor.u32 %v557, 2147483648
  %v588 = vmul.f32 %v587, 1.442695
  %v589 = vpow.pop %v588
  %v590 = vadd.f32 %v589, 1.0
  %v591 = vrcp.pop %v590
  %v592 = vmul.f32 1.0, %v591
  %v593 = vtanh.pop %v557
  %v594 = vmul.f32 %v592, %v496
  %596 = vrot.lane.b32.xlu0 %v593, 64
  %v597 = vpop.permute.xlu0 %596
  %v599 = vmul.f32 %v592, %v597
  %601 = vrot.lane.b32.xlu0 %v599, 32
  %v602 = vpop.permute.xlu0 %601
  %v604 = vadd.f32 %v594, %v602
  %v605 = vtanh.pop %v604
  %607 = vrot.lane.b32.xlu0 %v605, 64
  %v608 = vpop.permute.xlu0 %607
  %v610 = vmul.f32 %v592, %v608
  %612 = vrot.lane.b32.xlu0 %v610, 32
  %v613 = vpop.permute.xlu0 %612
  %615 = vst.msk [vmem:[#allocation3 + $0x10] sm:$0xff] %vm174, %v613
  %617 = vrot.lane.b32.xlu0 %v586, 32
  %v618 = vpop.permute.xlu0 %617
  %620 = vrot.lane.b32.xlu0 %v610, 64
  %v621 = vpop.permute.xlu0 %620
  %v623 = vsel %vm174, %v618, %v621
  %v624 = vpack.c.bf16 %v623, %v623
  %v626 = vsel %vm217, %v624, 0
  %628 = vmatprep.subr.bf16.mxu0 0
  %629 = vmatpush1.bf16.msra.mxu0 0
  %630 = vmatprep.subr.bf16.mxu0 0
  %631 = vmatpush1.bf16.msra.mxu0 0
  %632 = vmatprep.subr.bf16.mxu0 0
  %633 = vmatpush1.bf16.msra.mxu0 0
  %634 = vmatprep.subr.bf16.mxu0 0
  %635 = vmatpush1.bf16.msra.mxu0 0
  %636 = vmatprep.subr.bf16.mxu0 %v208
  %637 = vmatpush1.bf16.msra.mxu0 %v207
  %638 = vmatprep.subr.bf16.mxu0 %v206
  %639 = vmatpush1.bf16.msra.mxu0 %v205
  %640 = vmatprep.subr.bf16.mxu0 %v204
  %641 = vmatpush1.bf16.msra.mxu0 %v203
  %642 = vmatprep.subr.bf16.mxu0 %v202
  %643 = vmatpush1.bf16.msra.mxu0 %v201
  %644 = vmatprep.subr.bf16.mxu0 0
  %645 = vmatpush2.bf16.msra.mxu0 0
  %646 = vmatprep.subr.bf16.mxu0 0
  %647 = vmatpush2.bf16.msra.mxu0 0
  %648 = vmatprep.subr.bf16.mxu0 0
  %649 = vmatpush2.bf16.msra.mxu0 0
  %650 = vmatprep.subr.bf16.mxu0 0
  %651 = vmatpush2.bf16.msra.mxu0 0
  %652 = vmatprep.subr.bf16.mxu0 0
  %653 = vmatpush2.bf16.msra.mxu0 0
  %654 = vmatprep.subr.bf16.mxu0 0
  %655 = vmatpush2.bf16.msra.mxu0 0
  %656 = vmatprep.subr.bf16.mxu0 0
  %657 = vmatpush2.bf16.msra.mxu0 0
  %658 = vmatprep.subr.bf16.mxu0 0
  %659 = vmatpush2.bf16.msra.mxu0 0
  %660 = vmatprep.mubr.bf16.mxu0 0
  %661 = vmatmul.mubr.bf16.gmra.mxu0 %v626
  %v662 = vpop.f32.mrf.mxu0
  %v663 = vadd.f32 %v157, %v662
  %v664 = vpop.f32.mrf.mxu0
  %v665 = vadd.f32 %v161, %v664
  %v666 = vpop.f32.mrf.mxu0
  %v667 = vpop.f32.mrf.mxu0
  %668 = vdwg.mxu0
  %v669 = vld [vmem:[#allocation2 + $0x20] sm:$0xff]
  %v670 = vadd.f32 %v663, %v669
  %v671 = vxor.u32 %v670, 2147483648
  %v672 = vmul.f32 %v671, 1.442695
  %v673 = vpow.pop %v672
  %v674 = vadd.f32 %v673, 1.0
  %v675 = vrcp.pop %v674
  %v676 = vmul.f32 1.0, %v675
  %v677 = vtanh.pop %v670
  %v678 = vmul.f32 %v676, %v580
  %680 = vrot.lane.b32.xlu0 %v677, 64
  %v681 = vpop.permute.xlu0 %680
  %v683 = vmul.f32 %v676, %v681
  %685 = vrot.lane.b32.xlu0 %v683, 32
  %v686 = vpop.permute.xlu0 %685
  %v688 = vadd.f32 %v678, %v686
  %v689 = vtanh.pop %v688
  %691 = vrot.lane.b32.xlu0 %v689, 64
  %v692 = vpop.permute.xlu0 %691
  %v694 = vmul.f32 %v676, %v692
  %v695 = vxor.u32 %v665, 2147483648
  %v696 = vmul.f32 %v695, 1.442695
  %v697 = vpow.pop %v696
  %v698 = vadd.f32 %v697, 1.0
  %v699 = vrcp.pop %v698
  %v700 = vmul.f32 1.0, %v699
  %v701 = vtanh.pop %v665
  %v702 = vmul.f32 %v700, %v604
  %704 = vrot.lane.b32.xlu0 %v701, 64
  %v705 = vpop.permute.xlu0 %704
  %v707 = vmul.f32 %v700, %v705
  %709 = vrot.lane.b32.xlu0 %v707, 32
  %v710 = vpop.permute.xlu0 %709
  %v712 = vadd.f32 %v702, %v710
  %v713 = vtanh.pop %v712
  %715 = vrot.lane.b32.xlu0 %v713, 64
  %v716 = vpop.permute.xlu0 %715
  %v718 = vmul.f32 %v700, %v716
  %720 = vrot.lane.b32.xlu0 %v718, 32
  %v721 = vpop.permute.xlu0 %720
  %723 = vst.msk [vmem:[#allocation3 + $0x18] sm:$0xff] %vm174, %v721
  %725 = vrot.lane.b32.xlu0 %v694, 32
  %v726 = vpop.permute.xlu0 %725
  %728 = vrot.lane.b32.xlu0 %v718, 64
  %v729 = vpop.permute.xlu0 %728
  %v731 = vsel %vm174, %v726, %v729
  %v732 = vpack.c.bf16 %v731, %v731
  %v734 = vsel %vm217, %v732, 0
  %736 = vmatprep.subr.bf16.mxu0 0
  %737 = vmatpush1.bf16.msra.mxu0 0
  %738 = vmatprep.subr.bf16.mxu0 0
  %739 = vmatpush1.bf16.msra.mxu0 0
  %740 = vmatprep.subr.bf16.mxu0 0
  %741 = vmatpush1.bf16.msra.mxu0 0
  %742 = vmatprep.subr.bf16.mxu0 0
  %743 = vmatpush1.bf16.msra.mxu0 0
  %744 = vmatprep.subr.bf16.mxu0 %v208
  %745 = vmatpush1.bf16.msra.mxu0 %v207
  %746 = vmatprep.subr.bf16.mxu0 %v206
  %747 = vmatpush1.bf16.msra.mxu0 %v205
  %748 = vmatprep.subr.bf16.mxu0 %v204
  %749 = vmatpush1.bf16.msra.mxu0 %v203
  %750 = vmatprep.subr.bf16.mxu0 %v202
  %751 = vmatpush1.bf16.msra.mxu0 %v201
  %752 = vmatprep.subr.bf16.mxu0 0
  %753 = vmatpush2.bf16.msra.mxu0 0
  %754 = vmatprep.subr.bf16.mxu0 0
  %755 = vmatpush2.bf16.msra.mxu0 0
  %756 = vmatprep.subr.bf16.mxu0 0
  %757 = vmatpush2.bf16.msra.mxu0 0
  %758 = vmatprep.subr.bf16.mxu0 0
  %759 = vmatpush2.bf16.msra.mxu0 0
  %760 = vmatprep.subr.bf16.mxu0 0
  %761 = vmatpush2.bf16.msra.mxu0 0
  %762 = vmatprep.subr.bf16.mxu0 0
  %763 = vmatpush2.bf16.msra.mxu0 0
  %764 = vmatprep.subr.bf16.mxu0 0
  %765 = vmatpush2.bf16.msra.mxu0 0
  %766 = vmatprep.subr.bf16.mxu0 0
  %767 = vmatpush2.bf16.msra.mxu0 0
  %768 = vmatprep.mubr.bf16.mxu0 0
  %769 = vmatmul.mubr.bf16.gmra.mxu0 %v734
  %v770 = vpop.f32.mrf.mxu0
  %v771 = vadd.f32 %v157, %v770
  %v772 = vpop.f32.mrf.mxu0
  %v773 = vadd.f32 %v161, %v772
  %v774 = vpop.f32.mrf.mxu0
  %v775 = vpop.f32.mrf.mxu0
  %776 = vdwg.mxu0
  %v777 = vld [vmem:[#allocation2 + $0x28] sm:$0xff]
  %v778 = vadd.f32 %v771, %v777
  %v779 = vxor.u32 %v778, 2147483648
  %v780 = vmul.f32 %v779, 1.442695
  %v781 = vpow.pop %v780
  %v782 = vadd.f32 %v781, 1.0
  %v783 = vrcp.pop %v782
  %v784 = vmul.f32 1.0, %v783
  %v785 = vtanh.pop %v778
  %v786 = vmul.f32 %v784, %v688
  %788 = vrot.lane.b32.xlu0 %v785, 64
  %v789 = vpop.permute.xlu0 %788
  %v791 = vmul.f32 %v784, %v789
  %793 = vrot.lane.b32.xlu0 %v791, 32
  %v794 = vpop.permute.xlu0 %793
  %v796 = vadd.f32 %v786, %v794
  %v797 = vtanh.pop %v796
  %799 = vrot.lane.b32.xlu0 %v797, 64
  %v800 = vpop.permute.xlu0 %799
  %v802 = vmul.f32 %v784, %v800
  %v803 = vxor.u32 %v773, 2147483648
  %v804 = vmul.f32 %v803, 1.442695
  %v805 = vpow.pop %v804
  %v806 = vadd.f32 %v805, 1.0
  %v807 = vrcp.pop %v806
  %v808 = vmul.f32 1.0, %v807
  %v809 = vtanh.pop %v773
  %v810 = vmul.f32 %v808, %v712
  %812 = vrot.lane.b32.xlu0 %v809, 64
  %v813 = vpop.permute.xlu0 %812
  %v815 = vmul.f32 %v808, %v813
  %817 = vrot.lane.b32.xlu0 %v815, 32
  %v818 = vpop.permute.xlu0 %817
  %v820 = vadd.f32 %v810, %v818
  %v821 = vtanh.pop %v820
  %823 = vrot.lane.b32.xlu0 %v821, 64
  %v824 = vpop.permute.xlu0 %823
  %v826 = vmul.f32 %v808, %v824
  %828 = vrot.lane.b32.xlu0 %v826, 32
  %v829 = vpop.permute.xlu0 %828
  %831 = vst.msk [vmem:[#allocation3 + $0x20] sm:$0xff] %vm174, %v829
  %833 = vrot.lane.b32.xlu0 %v802, 32
  %v834 = vpop.permute.xlu0 %833
  %836 = vrot.lane.b32.xlu0 %v826, 64
  %v837 = vpop.permute.xlu0 %836
  %v839 = vsel %vm174, %v834, %v837
  %v840 = vpack.c.bf16 %v839, %v839
  %v842 = vsel %vm217, %v840, 0
  %844 = vmatprep.subr.bf16.mxu0 0
  %845 = vmatpush1.bf16.msra.mxu0 0
  %846 = vmatprep.subr.bf16.mxu0 0
  %847 = vmatpush1.bf16.msra.mxu0 0
  %848 = vmatprep.subr.bf16.mxu0 0
  %849 = vmatpush1.bf16.msra.mxu0 0
  %850 = vmatprep.subr.bf16.mxu0 0
  %851 = vmatpush1.bf16.msra.mxu0 0
  %852 = vmatprep.subr.bf16.mxu0 %v208
  %853 = vmatpush1.bf16.msra.mxu0 %v207
  %854 = vmatprep.subr.bf16.mxu0 %v206
  %855 = vmatpush1.bf16.msra.mxu0 %v205
  %856 = vmatprep.subr.bf16.mxu0 %v204
  %857 = vmatpush1.bf16.msra.mxu0 %v203
  %858 = vmatprep.subr.bf16.mxu0 %v202
  %859 = vmatpush1.bf16.msra.mxu0 %v201
  %860 = vmatprep.subr.bf16.mxu0 0
  %861 = vmatpush2.bf16.msra.mxu0 0
  %862 = vmatprep.subr.bf16.mxu0 0
  %863 = vmatpush2.bf16.msra.mxu0 0
  %864 = vmatprep.subr.bf16.mxu0 0
  %865 = vmatpush2.bf16.msra.mxu0 0
  %866 = vmatprep.subr.bf16.mxu0 0
  %867 = vmatpush2.bf16.msra.mxu0 0
  %868 = vmatprep.subr.bf16.mxu0 0
  %869 = vmatpush2.bf16.msra.mxu0 0
  %870 = vmatprep.subr.bf16.mxu0 0
  %871 = vmatpush2.bf16.msra.mxu0 0
  %872 = vmatprep.subr.bf16.mxu0 0
  %873 = vmatpush2.bf16.msra.mxu0 0
  %874 = vmatprep.subr.bf16.mxu0 0
  %875 = vmatpush2.bf16.msra.mxu0 0
  %876 = vmatprep.mubr.bf16.mxu0 0
  %877 = vmatmul.mubr.bf16.gmra.mxu0 %v842
  %v878 = vpop.f32.mrf.mxu0
  %v879 = vadd.f32 %v157, %v878
  %v880 = vpop.f32.mrf.mxu0
  %v881 = vadd.f32 %v161, %v880
  %v882 = vpop.f32.mrf.mxu0
  %v883 = vpop.f32.mrf.mxu0
  %884 = vdwg.mxu0
  %v885 = vld [vmem:[#allocation2 + $0x30] sm:$0xff]
  %v886 = vadd.f32 %v879, %v885
  %v887 = vxor.u32 %v886, 2147483648
  %v888 = vmul.f32 %v887, 1.442695
  %v889 = vpow.pop %v888
  %v890 = vadd.f32 %v889, 1.0
  %v891 = vrcp.pop %v890
  %v892 = vmul.f32 1.0, %v891
  %v893 = vtanh.pop %v886
  %v894 = vmul.f32 %v892, %v796
  %896 = vrot.lane.b32.xlu0 %v893, 64
  %v897 = vpop.permute.xlu0 %896
  %v899 = vmul.f32 %v892, %v897
  %901 = vrot.lane.b32.xlu0 %v899, 32
  %v902 = vpop.permute.xlu0 %901
  %v904 = vadd.f32 %v894, %v902
  %v905 = vtanh.pop %v904
  %907 = vrot.lane.b32.xlu0 %v905, 64
  %v908 = vpop.permute.xlu0 %907
  %v910 = vmul.f32 %v892, %v908
  %v911 = vxor.u32 %v881, 2147483648
  %v912 = vmul.f32 %v911, 1.442695
  %v913 = vpow.pop %v912
  %v914 = vadd.f32 %v913, 1.0
  %v915 = vrcp.pop %v914
  %v916 = vmul.f32 1.0, %v915
  %v917 = vtanh.pop %v881
  %v918 = vmul.f32 %v916, %v820
  %920 = vrot.lane.b32.xlu0 %v917, 64
  %v921 = vpop.permute.xlu0 %920
  %v923 = vmul.f32 %v916, %v921
  %925 = vrot.lane.b32.xlu0 %v923, 32
  %v926 = vpop.permute.xlu0 %925
  %v928 = vadd.f32 %v918, %v926
  %v929 = vtanh.pop %v928
  %931 = vrot.lane.b32.xlu0 %v929, 64
  %v932 = vpop.permute.xlu0 %931
  %v934 = vmul.f32 %v916, %v932
  %936 = vrot.lane.b32.xlu0 %v934, 32
  %v937 = vpop.permute.xlu0 %936
  %939 = vst.msk [vmem:[#allocation3 + $0x28] sm:$0xff] %vm174, %v937
  %941 = vrot.lane.b32.xlu0 %v910, 32
  %v942 = vpop.permute.xlu0 %941
  %944 = vrot.lane.b32.xlu0 %v934, 64
  %v945 = vpop.permute.xlu0 %944
  %v947 = vsel %vm174, %v942, %v945
  %v948 = vpack.c.bf16 %v947, %v947
  %v950 = vsel %vm217, %v948, 0
  %952 = vmatprep.subr.bf16.mxu0 0
  %953 = vmatpush1.bf16.msra.mxu0 0
  %954 = vmatprep.subr.bf16.mxu0 0
  %955 = vmatpush1.bf16.msra.mxu0 0
  %956 = vmatprep.subr.bf16.mxu0 0
  %957 = vmatpush1.bf16.msra.mxu0 0
  %958 = vmatprep.subr.bf16.mxu0 0
  %959 = vmatpush1.bf16.msra.mxu0 0
  %960 = vmatprep.subr.bf16.mxu0 %v208
  %961 = vmatpush1.bf16.msra.mxu0 %v207
  %962 = vmatprep.subr.bf16.mxu0 %v206
  %963 = vmatpush1.bf16.msra.mxu0 %v205
  %964 = vmatprep.subr.bf16.mxu0 %v204
  %965 = vmatpush1.bf16.msra.mxu0 %v203
  %966 = vmatprep.subr.bf16.mxu0 %v202
  %967 = vmatpush1.bf16.msra.mxu0 %v201
  %968 = vmatprep.subr.bf16.mxu0 0
  %969 = vmatpush2.bf16.msra.mxu0 0
  %970 = vmatprep.subr.bf16.mxu0 0
  %971 = vmatpush2.bf16.msra.mxu0 0
  %972 = vmatprep.subr.bf16.mxu0 0
  %973 = vmatpush2.bf16.msra.mxu0 0
  %974 = vmatprep.subr.bf16.mxu0 0
  %975 = vmatpush2.bf16.msra.mxu0 0
  %976 = vmatprep.subr.bf16.mxu0 0
  %977 = vmatpush2.bf16.msra.mxu0 0
  %978 = vmatprep.subr.bf16.mxu0 0
  %979 = vmatpush2.bf16.msra.mxu0 0
  %980 = vmatprep.subr.bf16.mxu0 0
  %981 = vmatpush2.bf16.msra.mxu0 0
  %982 = vmatprep.subr.bf16.mxu0 0
  %983 = vmatpush2.bf16.msra.mxu0 0
  %984 = vmatprep.mubr.bf16.mxu0 0
  %985 = vmatmul.mubr.bf16.gmra.mxu0 %v950
  %v986 = vpop.f32.mrf.mxu0
  %v987 = vadd.f32 %v157, %v986
  %v988 = vpop.f32.mrf.mxu0
  %v989 = vadd.f32 %v161, %v988
  %v990 = vpop.f32.mrf.mxu0
  %v991 = vpop.f32.mrf.mxu0
  %992 = vdwg.mxu0
  %v993 = vld [vmem:[#allocation2 + $0x38] sm:$0xff]
  %v994 = vadd.f32 %v987, %v993
  %v995 = vxor.u32 %v994, 2147483648
  %v996 = vmul.f32 %v995, 1.442695
  %v997 = vpow.pop %v996
  %v998 = vadd.f32 %v997, 1.0
  %v999 = vrcp.pop %v998
  %v1000 = vmul.f32 1.0, %v999
  %v1001 = vtanh.pop %v994
  %v1002 = vmul.f32 %v1000, %v904
  %1004 = vrot.lane.b32.xlu0 %v1001, 64
  %v1005 = vpop.permute.xlu0 %1004
  %v1007 = vmul.f32 %v1000, %v1005
  %1009 = vrot.lane.b32.xlu0 %v1007, 32
  %v1010 = vpop.permute.xlu0 %1009
  %v1012 = vadd.f32 %v1002, %v1010
  %v1013 = vtanh.pop %v1012
  %1015 = vrot.lane.b32.xlu0 %v1013, 64
  %v1016 = vpop.permute.xlu0 %1015
  %v1018 = vmul.f32 %v1000, %v1016
  %v1019 = vxor.u32 %v989, 2147483648
  %v1020 = vmul.f32 %v1019, 1.442695
  %v1021 = vpow.pop %v1020
  %v1022 = vadd.f32 %v1021, 1.0
  %v1023 = vrcp.pop %v1022
  %v1024 = vmul.f32 1.0, %v1023
  %v1025 = vtanh.pop %v989
  %v1026 = vmul.f32 %v1024, %v928
  %1028 = vrot.lane.b32.xlu0 %v1025, 64
  %v1029 = vpop.permute.xlu0 %1028
  %v1031 = vmul.f32 %v1024, %v1029
  %1033 = vrot.lane.b32.xlu0 %v1031, 32
  %v1034 = vpop.permute.xlu0 %1033
  %v1036 = vadd.f32 %v1026, %v1034
  %v1037 = vtanh.pop %v1036
  %1039 = vrot.lane.b32.xlu0 %v1037, 64
  %v1040 = vpop.permute.xlu0 %1039
  %v1042 = vmul.f32 %v1024, %v1040
  %1044 = vrot.lane.b32.xlu0 %v1042, 32
  %v1045 = vpop.permute.xlu0 %1044
  %1047 = vst.msk [vmem:[#allocation3 + $0x30] sm:$0xff] %vm174, %v1045
  %1049 = vrot.lane.b32.xlu0 %v1018, 32
  %v1050 = vpop.permute.xlu0 %1049
  %1052 = vrot.lane.b32.xlu0 %v1042, 64
  %v1053 = vpop.permute.xlu0 %1052
  %v1055 = vsel %vm174, %v1050, %v1053
  %v1056 = vpack.c.bf16 %v1055, %v1055
  %v1058 = vsel %vm217, %v1056, 0
  %1060 = vmatprep.subr.bf16.mxu0 0
  %1061 = vmatpush1.bf16.msra.mxu0 0
  %1062 = vmatprep.subr.bf16.mxu0 0
  %1063 = vmatpush1.bf16.msra.mxu0 0
  %1064 = vmatprep.subr.bf16.mxu0 0
  %1065 = vmatpush1.bf16.msra.mxu0 0
  %1066 = vmatprep.subr.bf16.mxu0 0
  %1067 = vmatpush1.bf16.msra.mxu0 0
  %1068 = vmatprep.subr.bf16.mxu0 %v208
  %1069 = vmatpush1.bf16.msra.mxu0 %v207
  %1070 = vmatprep.subr.bf16.mxu0 %v206
  %1071 = vmatpush1.bf16.msra.mxu0 %v205
  %1072 = vmatprep.subr.bf16.mxu0 %v204
  %1073 = vmatpush1.bf16.msra.mxu0 %v203
  %1074 = vmatprep.subr.bf16.mxu0 %v202
  %1075 = vmatpush1.bf16.msra.mxu0 %v201
  %1076 = vmatprep.subr.bf16.mxu0 0
  %1077 = vmatpush2.bf16.msra.mxu0 0
  %1078 = vmatprep.subr.bf16.mxu0 0
  %1079 = vmatpush2.bf16.msra.mxu0 0
  %1080 = vmatprep.subr.bf16.mxu0 0
  %1081 = vmatpush2.bf16.msra.mxu0 0
  %1082 = vmatprep.subr.bf16.mxu0 0
  %1083 = vmatpush2.bf16.msra.mxu0 0
  %1084 = vmatprep.subr.bf16.mxu0 0
  %1085 = vmatpush2.bf16.msra.mxu0 0
  %1086 = vmatprep.subr.bf16.mxu0 0
  %1087 = vmatpush2.bf16.msra.mxu0 0
  %1088 = vmatprep.subr.bf16.mxu0 0
  %1089 = vmatpush2.bf16.msra.mxu0 0
  %1090 = vmatprep.subr.bf16.mxu0 0
  %1091 = vmatpush2.bf16.msra.mxu0 0
  %1092 = vmatprep.mubr.bf16.mxu0 0
  %1093 = vmatmul.mubr.bf16.gmra.mxu0 %v1058
  %v1094 = vpop.f32.mrf.mxu0
  %v1095 = vpop.f32.mrf.mxu0
  %v1096 = vadd.f32 %v161, %v1095
  %v1097 = vpop.f32.mrf.mxu0
  %v1098 = vpop.f32.mrf.mxu0
  %1099 = vdwg.mxu0
  %v1100 = vxor.u32 %v1096, 2147483648
  %v1101 = vmul.f32 %v1100, 1.442695
  %v1102 = vpow.pop %v1101
  %v1103 = vadd.f32 %v1102, 1.0
  %v1104 = vrcp.pop %v1103
  %v1105 = vmul.f32 1.0, %v1104
  %v1106 = vtanh.pop %v1096
  %v1107 = vmul.f32 %v1105, %v1036
  %1109 = vrot.lane.b32.xlu0 %v1106, 64
  %v1110 = vpop.permute.xlu0 %1109
  %v1112 = vmul.f32 %v1105, %v1110
  %1114 = vrot.lane.b32.xlu0 %v1112, 32
  %v1115 = vpop.permute.xlu0 %1114
  %v1117 = vadd.f32 %v1107, %v1115
  %v1118 = vtanh.pop %v1117
  %1120 = vrot.lane.b32.xlu0 %v1118, 64
  %v1121 = vpop.permute.xlu0 %1120
  %v1123 = vmul.f32 %v1105, %v1121
  %1125 = vrot.lane.b32.xlu0 %v1123, 32
  %v1126 = vpop.permute.xlu0 %1125
  %1128 = vst.msk [vmem:[#allocation3 + $0x38] sm:$0xff] %vm174, %v1126
  %1129 = vrot.lane.b32.xlu0 %v1123, 64
  %v1130 = vpop.permute.xlu0 %1129
  %1133 = vrot.lane.b32.xlu0 %v1012, 32
  %v1134 = vpop.permute.xlu0 %1133
  %1137 = vrot.lane.b32.xlu0 %v1117, 64
  %v1138 = vpop.permute.xlu0 %1137
  %v1140 = vsel %vm174, %v1050, %v1130
  %v1141 = vsel %vm217, %v1140, %v1134
  %vm1142 = vcmask 785408
  %v1143 = vsel %vm1142, %v1141, %v1138
  %1144 = vst [vmem:[%s11] sm:$0xff] %v1143
  %v1145 = vld [vmem:[#allocation3] sm:$0xff]
  %v1146 = vld [vmem:[#allocation3 + $0x8] sm:$0xff]
  %v1147 = vld [vmem:[#allocation3 + $0x10] sm:$0xff]
  %v1148 = vld [vmem:[#allocation3 + $0x18] sm:$0xff]
  %v1149 = vld [vmem:[#allocation3 + $0x20] sm:$0xff]
  %v1150 = vld [vmem:[#allocation3 + $0x28] sm:$0xff]
  %v1151 = vld [vmem:[#allocation3 + $0x30] sm:$0xff]
  %v1152 = vld [vmem:[#allocation3 + $0x38] sm:$0xff]
  %v1153 = vpack.c.bf16 %v1146, %v1145
  %v1154 = vpack.c.bf16 %v1148, %v1147
  %v1155 = vpack.c.bf16 %v1150, %v1149
  %v1156 = vpack.c.bf16 %v1152, %v1151
  %v1157 = vld [vmem:[%s6] sm:$0xf]
  %v1158 = vld [vmem:[%s6 + $0x4] sm:$0xf]
  %v1159 = vld [vmem:[%s6 + $0x8] sm:$0xf]
  %v1160 = vld [vmem:[%s6 + $0xc] sm:$0xf]
  %v1161 = vld [vmem:[%s7] sm:$0x1]
  %v1163 = vlaneseq
  %v1164 = vshrl.u32 %v1163, 7
  %v1165 = vsub.s32 0, %v1164
  %v1166 = vrot.slane %v1161, %v1165
  %v1172 = vunpack.c.l.b16 %v1157
  %v1173 = vunpack.c.l.b16 %v1158
  %v1174 = vunpack.c.l.b16 %v1159
  %v1175 = vunpack.c.l.b16 %v1160
  %v1176 = vpack.c.b16 %v1173, %v1172
  %v1177 = vpack.c.b16 %v1175, %v1174
  %v1181 = vsel %vm174, %v1153, 0
  %v1184 = vsel %vm174, %v1154, 0
  %v1187 = vsel %vm174, %v1155, 0
  %v1190 = vsel %vm174, %v1156, 0
  %1192 = vmatprep.subr.bf16.mxu0 0
  %1193 = vmatpush1.bf16.msra.mxu0 0
  %1194 = vmatprep.subr.bf16.mxu0 0
  %1195 = vmatpush1.bf16.msra.mxu0 0
  %1196 = vmatprep.subr.bf16.mxu0 0
  %1197 = vmatpush1.bf16.msra.mxu0 0
  %1198 = vmatprep.subr.bf16.mxu0 0
  %1199 = vmatpush1.bf16.msra.mxu0 0
  %1200 = vmatprep.subr.bf16.mxu0 0
  %1201 = vmatpush1.bf16.msra.mxu0 0
  %1202 = vmatprep.subr.bf16.mxu0 0
  %1203 = vmatpush1.bf16.msra.mxu0 0
  %1204 = vmatprep.subr.bf16.mxu0 0
  %1205 = vmatpush1.bf16.msra.mxu0 %v1177
  %1206 = vmatprep.subr.bf16.mxu0 0
  %1207 = vmatpush1.bf16.msra.mxu0 %v1176
  %1208 = vmatprep.subr.bf16.mxu0 0
  %1209 = vmatpush2.bf16.msra.mxu0 0
  %1210 = vmatprep.subr.bf16.mxu0 0
  %1211 = vmatpush2.bf16.msra.mxu0 0
  %1212 = vmatprep.subr.bf16.mxu0 0
  %1213 = vmatpush2.bf16.msra.mxu0 0
  %1214 = vmatprep.subr.bf16.mxu0 0
  %1215 = vmatpush2.bf16.msra.mxu0 0
  %1216 = vmatprep.subr.bf16.mxu0 0
  %1217 = vmatpush2.bf16.msra.mxu0 0
  %1218 = vmatprep.subr.bf16.mxu0 0
  %1219 = vmatpush2.bf16.msra.mxu0 0
  %1220 = vmatprep.subr.bf16.mxu0 0
  %1221 = vmatpush2.bf16.msra.mxu0 0
  %1222 = vmatprep.subr.bf16.mxu0 0
  %1223 = vmatpush2.bf16.msra.mxu0 0
  %1224 = vmatprep.mubr.bf16.mxu0 0
  %1225 = vmatmul.mubr.bf16.gmra.mxu0 %v1181
  %v1226 = vpop.f32.mrf.mxu0
  %v1227 = vadd.f32 %v1166, %v1226
  %v1228 = vpop.f32.mrf.mxu0
  %v1229 = vpop.f32.mrf.mxu0
  %v1230 = vadd.f32 %v1166, %v1229
  %v1231 = vpop.f32.mrf.mxu0
  %1232 = vmatprep.mubr.bf16.mxu0 0
  %1233 = vmatmul.mubr.bf16.gmra.mxu0 %v1184
  %v1234 = vpop.f32.mrf.mxu0
  %v1235 = vadd.f32 %v1166, %v1234
  %v1236 = vpop.f32.mrf.mxu0
  %v1237 = vpop.f32.mrf.mxu0
  %v1238 = vadd.f32 %v1166, %v1237
  %v1239 = vpop.f32.mrf.mxu0
  %1240 = vmatprep.mubr.bf16.mxu0 0
  %1241 = vmatmul.mubr.bf16.gmra.mxu0 %v1187
  %v1242 = vpop.f32.mrf.mxu0
  %v1243 = vadd.f32 %v1166, %v1242
  %v1244 = vpop.f32.mrf.mxu0
  %v1245 = vpop.f32.mrf.mxu0
  %v1246 = vadd.f32 %v1166, %v1245
  %v1247 = vpop.f32.mrf.mxu0
  %1248 = vmatprep.mubr.bf16.mxu0 0
  %1249 = vmatmul.mubr.bf16.gmra.mxu0 %v1190
  %v1250 = vpop.f32.mrf.mxu0
  %v1251 = vadd.f32 %v1166, %v1250
  %v1252 = vpop.f32.mrf.mxu0
  %v1253 = vpop.f32.mrf.mxu0
  %v1254 = vadd.f32 %v1166, %v1253
  %v1255 = vpop.f32.mrf.mxu0
  %1256 = vdwg.mxu0
  %v1257 = vmax.f32 %v1227, 0.0
  %v1258 = vmax.f32 %v1230, 0.0
  %v1259 = vmax.f32 %v1235, 0.0
  %v1260 = vmax.f32 %v1238, 0.0
  %v1261 = vmax.f32 %v1243, 0.0
  %v1262 = vmax.f32 %v1246, 0.0
  %v1263 = vmax.f32 %v1251, 0.0
  %v1264 = vmax.f32 %v1254, 0.0
  %v1265 = vpack.c.bf16 %v1258, %v1257
  %v1266 = vpack.c.bf16 %v1260, %v1259
  %v1267 = vpack.c.bf16 %v1262, %v1261
  %v1268 = vpack.c.bf16 %v1264, %v1263
  %v1269 = vld [vmem:[%s8] sm:$0xf]
  %v1270 = vld [vmem:[%s8 + $0x4] sm:$0xf]
  %v1271 = vld [vmem:[%s8 + $0x8] sm:$0xf]
  %v1272 = vld [vmem:[%s8 + $0xc] sm:$0xf]
  %v1273 = vld [vmem:[%s8 + $0x10] sm:$0xf]
  %v1274 = vld [vmem:[%s8 + $0x14] sm:$0xf]
  %v1275 = vld [vmem:[%s8 + $0x18] sm:$0xf]
  %v1276 = vld [vmem:[%s8 + $0x1c] sm:$0xf]
  %v1277 = vld [vmem:[%s9] sm:$0x1]
  %v1279 = vlaneseq
  %v1280 = vshrl.u32 %v1279, 7
  %v1281 = vsub.s32 0, %v1280
  %v1282 = vrot.slane %v1277, %v1281
  %v1292 = vunpack.c.l.b16 %v1269
  %v1293 = vunpack.c.l.b16 %v1270
  %v1294 = vunpack.c.l.b16 %v1271
  %v1295 = vunpack.c.l.b16 %v1272
  %v1296 = vunpack.c.l.b16 %v1273
  %v1297 = vunpack.c.l.b16 %v1274
  %v1298 = vunpack.c.l.b16 %v1275
  %v1299 = vunpack.c.l.b16 %v1276
  %v1300 = vpack.c.b16 %v1293, %v1292
  %v1301 = vpack.c.b16 %v1295, %v1294
  %v1302 = vpack.c.b16 %v1297, %v1296
  %v1303 = vpack.c.b16 %v1299, %v1298
  %v1309 = vsel %vm217, %v1265, 0
  %v1312 = vsel %vm217, %v1266, 0
  %v1315 = vsel %vm217, %v1267, 0
  %v1318 = vsel %vm217, %v1268, 0
  %1320 = vmatprep.subr.bf16.mxu0 0
  %1321 = vmatpush1.bf16.msra.mxu0 0
  %1322 = vmatprep.subr.bf16.mxu0 0
  %1323 = vmatpush1.bf16.msra.mxu0 0
  %1324 = vmatprep.subr.bf16.mxu0 0
  %1325 = vmatpush1.bf16.msra.mxu0 0
  %1326 = vmatprep.subr.bf16.mxu0 0
  %1327 = vmatpush1.bf16.msra.mxu0 0
  %1328 = vmatprep.subr.bf16.mxu0 0
  %1329 = vmatpush1.bf16.msra.mxu0 %v1303
  %1330 = vmatprep.subr.bf16.mxu0 0
  %1331 = vmatpush1.bf16.msra.mxu0 %v1302
  %1332 = vmatprep.subr.bf16.mxu0 0
  %1333 = vmatpush1.bf16.msra.mxu0 %v1301
  %1334 = vmatprep.subr.bf16.mxu0 0
  %1335 = vmatpush1.bf16.msra.mxu0 %v1300
  %1336 = vmatprep.subr.bf16.mxu0 0
  %1337 = vmatpush2.bf16.msra.mxu0 0
  %1338 = vmatprep.subr.bf16.mxu0 0
  %1339 = vmatpush2.bf16.msra.mxu0 0
  %1340 = vmatprep.subr.bf16.mxu0 0
  %1341 = vmatpush2.bf16.msra.mxu0 0
  %1342 = vmatprep.subr.bf16.mxu0 0
  %1343 = vmatpush2.bf16.msra.mxu0 0
  %1344 = vmatprep.subr.bf16.mxu0 0
  %1345 = vmatpush2.bf16.msra.mxu0 0
  %1346 = vmatprep.subr.bf16.mxu0 0
  %1347 = vmatpush2.bf16.msra.mxu0 0
  %1348 = vmatprep.subr.bf16.mxu0 0
  %1349 = vmatpush2.bf16.msra.mxu0 0
  %1350 = vmatprep.subr.bf16.mxu0 0
  %1351 = vmatpush2.bf16.msra.mxu0 0
  %1352 = vmatprep.mubr.bf16.mxu0 0
  %1353 = vmatmul.mubr.bf16.gmra.mxu0 %v1309
  %v1354 = vpop.f32.mrf.mxu0
  %v1355 = vadd.f32 %v1282, %v1354
  %v1356 = vpop.f32.mrf.mxu0
  %v1357 = vpop.f32.mrf.mxu0
  %v1358 = vadd.f32 %v1282, %v1357
  %v1359 = vpop.f32.mrf.mxu0
  %1360 = vmatprep.mubr.bf16.mxu0 0
  %1361 = vmatmul.mubr.bf16.gmra.mxu0 %v1312
  %v1362 = vpop.f32.mrf.mxu0
  %v1363 = vadd.f32 %v1282, %v1362
  %v1364 = vpop.f32.mrf.mxu0
  %v1365 = vpop.f32.mrf.mxu0
  %v1366 = vadd.f32 %v1282, %v1365
  %v1367 = vpop.f32.mrf.mxu0
  %1368 = vmatprep.mubr.bf16.mxu0 0
  %1369 = vmatmul.mubr.bf16.gmra.mxu0 %v1315
  %v1370 = vpop.f32.mrf.mxu0
  %v1371 = vadd.f32 %v1282, %v1370
  %v1372 = vpop.f32.mrf.mxu0
  %v1373 = vpop.f32.mrf.mxu0
  %v1374 = vadd.f32 %v1282, %v1373
  %v1375 = vpop.f32.mrf.mxu0
  %1376 = vmatprep.mubr.bf16.mxu0 0
  %1377 = vmatmul.mubr.bf16.gmra.mxu0 %v1318
  %v1378 = vpop.f32.mrf.mxu0
  %v1379 = vadd.f32 %v1282, %v1378
  %v1380 = vpop.f32.mrf.mxu0
  %v1381 = vpop.f32.mrf.mxu0
  %v1382 = vadd.f32 %v1282, %v1381
  %v1383 = vpop.f32.mrf.mxu0
  %1384 = vdwg.mxu0
  %1386 = vrot.lane.b32.xlu0 %v1358, 16
  %v1387 = vpop.permute.xlu0 %1386
  %1390 = vrot.lane.b32.xlu0 %v1363, 32
  %v1391 = vpop.permute.xlu0 %1390
  %1394 = vrot.lane.b32.xlu0 %v1366, 48
  %v1395 = vpop.permute.xlu0 %1394
  %1398 = vrot.lane.b32.xlu0 %v1371, 64
  %v1399 = vpop.permute.xlu0 %1398
  %1402 = vrot.lane.b32.xlu0 %v1374, 80
  %v1403 = vpop.permute.xlu0 %1402
  %1406 = vrot.lane.b32.xlu0 %v1379, 96
  %v1407 = vpop.permute.xlu0 %1406
  %1410 = vrot.lane.b32.xlu0 %v1382, 112
  %v1411 = vpop.permute.xlu0 %1410
  %v1413 = vsel %vm58, %v1355, %v1387
  %v1414 = vsel %vm174, %v1413, %v1391
  %vm1415 = vcmask 392192
  %v1416 = vsel %vm1415, %v1414, %v1395
  %v1417 = vsel %vm217, %v1416, %v1399
  %vm1418 = vcmask 654336
  %v1419 = vsel %vm1418, %v1417, %v1403
  %v1420 = vsel %vm1142, %v1419, %v1407
  %vm1421 = vcmask 916480
  %v1422 = vsel %vm1421, %v1420, %v1411
  %1423 = vst [vmem:[%s10] sm:$0xff] %v1422
  // Predicated region
  $region42: #{lstm_model_forward.1} parent=0 // pred_check
    _
  $region43: #{lstm_model_forward.1} parent=0 // pred_check_branch
    %1425 = sbr.rel (0) target = $region45
  $region44: #{lstm_model_forward.1} parent=0 // pred_region
    _
  $region45: #{lstm_model_forward.1} parent=0 // pred_fallthru
    _
  // Predicated region
  $region46: #{lstm_model_forward.1} parent=0 // pred_check
    _
  $region47: #{lstm_model_forward.1} parent=0 // pred_check_branch
    %1427 = sbr.rel (0) target = $region49
  $region48: #{lstm_model_forward.1} parent=0 // pred_region
    _
  $region49: #{lstm_model_forward.1} parent=0 // pred_fallthru
    _
  // Predicated region
  $region50: #{lstm_model_forward.1} parent=0 // pred_check
    _
  $region51: #{lstm_model_forward.1} parent=0 // pred_check_branch
    %1429 = sbr.rel (0) target = $region53
  $region52: #{lstm_model_forward.1} parent=0 // pred_region
    _
  $region53: #{lstm_model_forward.1} parent=0 // pred_fallthru
    _
  // Predicated region
  $region54: #{lstm_model_forward.1} parent=0 // pred_check
    _
  $region55: #{lstm_model_forward.1} parent=0 // pred_check_branch
    %1431 = sbr.rel (0) target = $region57
  $region56: #{lstm_model_forward.1} parent=0 // pred_region
    _
  $region57: #{lstm_model_forward.1} parent=0 // pred_fallthru
    _

</llo_original>
